<compile_context>
chip_gen: v6e
topology: v6e:2x2x1
jax: 0.10.0
libtpu: 0.0.40
codegen_flags: <defaults>
</compile_context>

<pallas_src>
import math
import functools

import jax
import jax.numpy as jnp
import numpy as np
from jax.experimental import pallas as pl
from jax.experimental.pallas import tpu as pltpu

EPS = 1e-5  # PyTorch LayerNorm default eps


def _round_up(n, m):
    return ((n + m - 1) // m) * m


def _vmem_limit_bytes(frac=0.75, fallback=48 * 1024 * 1024):
    # Generation-aware VMEM limit: ~96 MiB on v5e/v6e (128 MiB physical),
    # ~48 MiB on v7x (64 MiB physical).  Conservative fallback if the query fails.
    try:
        cap = int(pltpu.get_tpu_info().vmem_capacity_bytes)
        return int(cap * frac)
    except Exception:
        return fallback


def _const_spec(shape):
    # BlockSpec for a block that is identical at every grid step: single-buffered
    # (pl.Buffered(1)) when the installed jax supports pipeline_mode, so constant
    # weights are not pointlessly double-buffered.
    idx = lambda *_: (0,) * len(shape)
    if hasattr(pl, "Buffered"):
        try:
            return pl.BlockSpec(shape, idx, pipeline_mode=pl.Buffered(1))
        except TypeError:
            pass
    return pl.BlockSpec(shape, idx)


# ----------------------------- in-kernel helpers -----------------------------

def _layernorm(x, g, b):
    mu = jnp.mean(x, axis=-1, keepdims=True)
    xc = x - mu
    var = jnp.mean(xc * xc, axis=-1, keepdims=True)
    return xc * jax.lax.rsqrt(var + EPS) * g + b


def _erf(x):
    # Abramowitz & Stegun 7.1.26, max abs error ~1.5e-7 — reproduces exact-GELU
    # (PyTorch nn.GELU default) using only exp/mul/add + one EUP reciprocal.
    a1, a2, a3, a4, a5 = 0.254829592, -0.284496736, 1.421413741, -1.453152027, 1.061405429
    p = 0.3275911
    sgn = jnp.where(x >= 0.0, 1.0, -1.0)
    ax = jnp.abs(x)
    t = pl.reciprocal(1.0 + p * ax, approx=True)   # divide -> EUP slot
    poly = ((((a5 * t + a4) * t + a3) * t + a2) * t + a1) * t
    return sgn * (1.0 - poly * jnp.exp(-ax * ax))
    # TODO(synk): on v6e/v7x the polynomial could run in bf16 VALU for extra throughput;
    # kept f32 here for accuracy margin (v5e has no bf16 VPU anyway).


def _gelu_exact(x):
    return 0.5 * x * (1.0 + _erf(x * (1.0 / math.sqrt(2.0))))


# ----------------------------- kernels -----------------------------

def mha_fused_kernel(x_ref, win_ref, bin_ref, g1_ref, beta1_ref,
                     wqkv_ref, bqkv_ref, wo_ref, bo_ref, g2_ref, beta2_ref,
                     o_ref, qkv_s, ctx_s, *, num_heads, head_dim):
    # One batch element per grid step.  Fuses: input_proj -> LN1 -> MHA -> residual -> LN2.
    # Full-width QKV projection + full-width output projection; per-head work is only
    # the (S,S) score / softmax / (S,hd) context, written into ctx_s at static lane
    # offsets so each iteration's temporaries die at the store.
    cdt = win_ref.dtype                                     # compute dtype (bf16)
    H = num_heads * head_dim
    x = x_ref[0]                                            # (S, Din) bf16

    # input projection + LayerNorm1 (residual basis kept in f32)
    h = jnp.dot(x, win_ref[...], preferred_element_type=jnp.float32) + bin_ref[...]
    h = _layernorm(h, g1_ref[...], beta1_ref[...])          # (S, H) f32
    hc = h.astype(cdt)

    # ONE (S,H)@(H,3H) projection for all heads' Q|K|V, staged in a bf16 scratch.
    qkv = jnp.dot(hc, wqkv_ref[...], preferred_element_type=jnp.float32) + bqkv_ref[...]
    qkv_s[...] = qkv.astype(cdt)                            # (S, 3H)

    scale = 1.0 / math.sqrt(head_dim)
    # Static head loop with static lane offsets (no dynamic lane slicing -> robust
    # lowering); per-head temporaries are bounded by the ctx_s store.
    # TODO(synk): for long S / small B on v7x, add a query-tile grid axis with
    # flash-style online softmax so both TensorCores get parallel blocks.
    for hh in range(num_heads):
        o = hh * head_dim
        q = qkv_s[:, o:o + head_dim]                        # (S, hd) bf16
        k = qkv_s[:, H + o:H + o + head_dim]
        v = qkv_s[:, 2 * H + o:2 * H + o + head_dim]
        s = jax.lax.dot_general(q, k, (((1,), (1,)), ((), ())),
                                preferred_element_type=jnp.float32) * scale
        s = s - jnp.max(s, axis=-1, keepdims=True)
        p = jnp.exp(s)
        p = p / jnp.sum(p, axis=-1, keepdims=True)          # exact softmax denominator
        ctx = jnp.dot(p.astype(cdt), v, preferred_element_type=jnp.float32)   # (S, hd)
        ctx_s[:, o:o + head_dim] = ctx.astype(cdt)

    # ONE (S,H)@(H,H) output projection (mathematically identical to concat(ctx_h) @ Wo).
    attn = jnp.dot(ctx_s[...], wo_ref[...], preferred_element_type=jnp.float32) + bo_ref[...]
    o_ref[0] = _layernorm(h + attn, g2_ref[...], beta2_ref[...]).astype(o_ref.dtype)


def ffn_stack_kernel(x_ref, w1_ref, b1_ref, w2_ref, b2_ref, g_ref, beta_ref,
                     o_ref, h_scr):
    # grid = (row_tiles, num_layers); only one layer's weights are resident per step.
    # h <- LN(h + W2 @ GELU(W1 @ h))   (dropout = identity)
    l = pl.program_id(1)

    @pl.when(l == 0)
    def _():
        h_scr[...] = x_ref[...].astype(jnp.float32)

    cdt = w1_ref.dtype
    h = h_scr[...]                                          # (tm, H) f32
    a = jnp.dot(h.astype(cdt), w1_ref[0], preferred_element_type=jnp.float32) + b1_ref[0]
    a = _gelu_exact(a)
    y = jnp.dot(a.astype(cdt), w2_ref[0], preferred_element_type=jnp.float32) + b2_ref[0]
    h = _layernorm(h + y, g_ref[0], beta_ref[0])
    h_scr[...] = h

    @pl.when(l == pl.num_programs(1) - 1)
    def _():
        o_ref[...] = h.astype(o_ref.dtype)


def pool_proj_ln_kernel(x_ref, w_ref, b_ref, g_ref, beta_ref, o_ref):
    # mean over sequence dim, output projection, final LayerNorm; Bt batch rows per step.
    cdt = w_ref.dtype
    x = x_ref[...].astype(jnp.float32)                      # (Bt, S, H)
    m = jnp.mean(x, axis=1)                                 # (Bt, H)
    y = jnp.dot(m.astype(cdt), w_ref[...],
                preferred_element_type=jnp.float32) + b_ref[...]
    o_ref[...] = _layernorm(y, g_ref[...], beta_ref[...]).astype(o_ref.dtype)


# ----------------------------- pallas_call wrappers -----------------------------

def mha_fused(x, w_in, b_in, g1, beta1, w_qkv, b_qkv, wo, bo, g2, beta2,
              num_heads, head_dim, out_dtype=jnp.bfloat16):
    B, S, Din = x.shape
    H = num_heads * head_dim
    kern = functools.partial(mha_fused_kernel, num_heads=num_heads, head_dim=head_dim)

    return pl.pallas_call(
        kern,
        out_shape=jax.ShapeDtypeStruct((B, S, H), out_dtype),
        grid=(B,),
        in_specs=[
            pl.BlockSpec((1, S, Din), lambda b: (b, 0, 0)),
            _const_spec((Din, H)),
            _const_spec((1, H)), _const_spec((1, H)), _const_spec((1, H)),
            _const_spec((H, 3 * H)),
            _const_spec((1, 3 * H)),
            _const_spec((H, H)),
            _const_spec((1, H)), _const_spec((1, H)), _const_spec((1, H)),
        ],
        out_specs=pl.BlockSpec((1, S, H), lambda b: (b, 0, 0)),
        scratch_shapes=[pltpu.VMEM((S, 3 * H), w_qkv.dtype),   # staged Q|K|V (bf16)
                        pltpu.VMEM((S, H), w_qkv.dtype)],      # per-head context accumulator
        compiler_params=pltpu.CompilerParams(
            dimension_semantics=("parallel",),
            vmem_limit_bytes=_vmem_limit_bytes()),
    )(x, w_in, b_in, g1, beta1, w_qkv, b_qkv, wo, bo, g2, beta2)


def ffn_stack(x2d, w1, b1, w2, b2, g, beta, out_dtype=jnp.bfloat16):
    N, H = x2d.shape
    L, _, Hf = w1.shape
    # MXU-friendly row tile: 256 once enough rows exist, otherwise one padded tile.
    # TODO(synk): on v7x (64 MiB VMEM) tm=128 may be preferable for very large H.
    tm = 256 if N >= 256 else _round_up(N, 8)
    Np = _round_up(N, tm)
    xp = jnp.pad(x2d, ((0, Np - N), (0, 0))) if Np != N else x2d

    out = pl.pallas_call(
        ffn_stack_kernel,
        out_shape=jax.ShapeDtypeStruct((Np, H), out_dtype),
        grid=(Np // tm, L),
        in_specs=[
            pl.BlockSpec((tm, H), lambda i, l: (i, 0)),
            pl.BlockSpec((1, H, Hf), lambda i, l: (l, 0, 0)),   # per-layer streamed
            pl.BlockSpec((1, 1, Hf), lambda i, l: (l, 0, 0)),
            pl.BlockSpec((1, Hf, H), lambda i, l: (l, 0, 0)),
            pl.BlockSpec((1, 1, H), lambda i, l: (l, 0, 0)),
            pl.BlockSpec((1, 1, H), lambda i, l: (l, 0, 0)),
            pl.BlockSpec((1, 1, H), lambda i, l: (l, 0, 0)),
        ],
        out_specs=pl.BlockSpec((tm, H), lambda i, l: (i, 0)),
        scratch_shapes=[pltpu.VMEM((tm, H), jnp.float32)],      # residual stream across layers
        compiler_params=pltpu.CompilerParams(
            dimension_semantics=("parallel", "arbitrary"),
            vmem_limit_bytes=_vmem_limit_bytes()),
    )(xp, w1, b1, w2, b2, g, beta)
    return out[:N] if Np != N else out


def pool_proj_ln(x, w, b, g, beta, block_b=128):
    # TODO(synk): the mean-pool could be fused into the FFN stack epilogue to avoid
    # re-reading the (B,S,H) activation from HBM.
    B, S, H = x.shape
    O = w.shape[1]
    Bt = min(B, block_b)
    Bp = _round_up(B, Bt)
    xp = jnp.pad(x, ((0, Bp - B), (0, 0), (0, 0))) if Bp != B else x
    out = pl.pallas_call(
        pool_proj_ln_kernel,
        out_shape=jax.ShapeDtypeStruct((Bp, O), jnp.float32),
        grid=(Bp // Bt,),
        in_specs=[
            pl.BlockSpec((Bt, S, H), lambda i: (i, 0, 0)),
            _const_spec((H, O)),
            _const_spec((1, O)), _const_spec((1, O)), _const_spec((1, O)),
        ],
        out_specs=pl.BlockSpec((Bt, O), lambda i: (i, 0)),
        compiler_params=pltpu.CompilerParams(dimension_semantics=("parallel",)),
    )(xp, w, b, g, beta)
    return out[:B] if Bp != B else out


# ----------------------------- full forward (glue in plain JAX) -----------------------------

def enhanced_projection_forward(x, p, num_heads=8, compute_dtype=jnp.bfloat16):
    # TODO(synk): the 2-D (no sequence dim) input branch of the PyTorch module (skips
    # attention and pooling) is not implemented; only the 3-D path is covered.
    B, S, Din = x.shape
    H = p["w_in"].shape[1]
    assert H % num_heads == 0
    hd = H // num_heads
    cdt = compute_dtype

    # Single fused Q|K|V panel (H, 3H) and its bias (1, 3H): one full-width projection.
    w_qkv = jnp.concatenate([p["wq"], p["wk"], p["wv"]], axis=1).astype(cdt)
    b_qkv = jnp.concatenate([p["bq"], p["bk"], p["bv"]], axis=1)   # f32

    h = mha_fused(x.astype(cdt), p["w_in"].astype(cdt), p["b_in"], p["g1"], p["beta1"],
                  w_qkv, b_qkv, p["wo"].astype(cdt), p["bo"], p["g2"], p["beta2"],
                  num_heads, hd)                                   # (B,S,H) bf16

    w1s = jnp.stack(p["w1"]).astype(cdt)        # (L, H, 4H)
    b1s = jnp.stack(p["b1"])                    # (L, 1, 4H)  f32
    w2s = jnp.stack(p["w2"]).astype(cdt)        # (L, 4H, H)
    b2s = jnp.stack(p["b2"])                    # (L, 1, H)   f32
    gs = jnp.stack(p["g_ffn"])
    bes = jnp.stack(p["beta_ffn"])
    h2 = ffn_stack(h.reshape(B * S, H), w1s, b1s, w2s, b2s, gs, bes)   # (B*S,H) bf16
    h3 = h2.reshape(B, S, H)

    return pool_proj_ln(h3, p["w_out"].astype(cdt), p["b_out"],
                        p["g_out"], p["beta_out"])


# ----------------------------- pure-JAX reference (f32, exact) -----------------------------

def reference_forward(x, p, num_heads=8):
    dot = functools.partial(jnp.matmul, precision=jax.lax.Precision.HIGHEST)

    def ln(v, g, b):
        mu = v.mean(-1, keepdims=True)
        var = ((v - mu) ** 2).mean(-1, keepdims=True)
        return (v - mu) / jnp.sqrt(var + EPS) * g + b

    def gelu(v):
        return 0.5 * v * (1.0 + jax.scipy.special.erf(v / jnp.sqrt(2.0)))

    h = ln(dot(x, p["w_in"]) + p["b_in"], p["g1"], p["beta1"])
    B, S, H = h.shape
    hd = H // num_heads
    q = (dot(h, p["wq"]) + p["bq"]).reshape(B, S, num_heads, hd).transpose(0, 2, 1, 3)
    k = (dot(h, p["wk"]) + p["bk"]).reshape(B, S, num_heads, hd).transpose(0, 2, 1, 3)
    v = (dot(h, p["wv"]) + p["bv"]).reshape(B, S, num_heads, hd).transpose(0, 2, 1, 3)
    s = jnp.einsum("bnqd,bnkd->bnqk", q, k, precision=jax.lax.Precision.HIGHEST) / math.sqrt(hd)
    a = jax.nn.softmax(s, axis=-1)
    ctx = jnp.einsum("bnqk,bnkd->bnqd", a, v,
                     precision=jax.lax.Precision.HIGHEST).transpose(0, 2, 1, 3).reshape(B, S, H)
    h = ln(h + dot(ctx, p["wo"]) + p["bo"], p["g2"], p["beta2"])
    for i in range(len(p["w1"])):
        y = dot(gelu(dot(h, p["w1"][i]) + p["b1"][i]), p["w2"][i]) + p["b2"][i]
        h = ln(h + y, p["g_ffn"][i], p["beta_ffn"][i])
    h = h.mean(axis=1)
    return ln(dot(h, p["w_out"]) + p["b_out"], p["g_out"], p["beta_out"])


# ----------------------------- deterministic param init -----------------------------

def init_params(key, input_dim, hidden_dim, output_dim, num_layers):
    keys = iter(jax.random.split(key, 64))

    def w(shape, scale=0.05):
        return (scale * jax.random.normal(next(keys), shape)).astype(jnp.float32)

    def vec(n, scale=0.02):
        return (scale * jax.random.normal(next(keys), (1, n))).astype(jnp.float32)

    def gamma(n):
        return (1.0 + 0.1 * jax.random.normal(next(keys), (1, n))).astype(jnp.float32)

    H, Hf = hidden_dim, hidden_dim * 4
    p = dict(
        w_in=w((input_dim, H)), b_in=vec(H), g1=gamma(H), beta1=vec(H),
        wq=w((H, H)), bq=vec(H), wk=w((H, H)), bk=vec(H),
        wv=w((H, H)), bv=vec(H), wo=w((H, H)), bo=vec(H),
        g2=gamma(H), beta2=vec(H),
        w1=[w((H, Hf)) for _ in range(num_layers)],
        b1=[vec(Hf) for _ in range(num_layers)],
        w2=[w((Hf, H)) for _ in range(num_layers)],
        b2=[vec(H) for _ in range(num_layers)],
        g_ffn=[gamma(H) for _ in range(num_layers)],
        beta_ffn=[vec(H) for _ in range(num_layers)],
        w_out=w((H, output_dim)), b_out=vec(output_dim),
        g_out=gamma(output_dim), beta_out=vec(output_dim),
    )
    return p


# TODO(synk): dropout layers are identity here (eval/inference semantics); train-mode
# stochastic dropout is not reproduced.

if __name__ == "__main__":
    B, S = 2, 8
    input_dim, hidden_dim, output_dim, num_layers = 32, 32, 16, 2  # hidden % 8 heads == 0

    key = jax.random.PRNGKey(0)
    k_x, k_p = jax.random.split(key)
    x = jax.random.normal(k_x, (B, S, input_dim), dtype=jnp.float32)
    params = init_params(k_p, input_dim, hidden_dim, output_dim, num_layers)

    out = jax.block_until_ready(enhanced_projection_forward(x, params))
    ref = jax.block_until_ready(reference_forward(x, params))
    assert out.shape == (B, output_dim)
    # Tolerance vs the pure-f32 reference: matmul operands go through bf16 (MXU-native)
    # with f32 accumulation, and inter-kernel activations are bf16; residual /
    # LayerNorm / softmax math stays f32 inside the kernels.
    np.testing.assert_allclose(np.asarray(out), np.asarray(ref), atol=5e-2, rtol=5e-2)

    print("KERNEL_OK")
</pallas_src>

<mosaic_0001>
module attributes {stable_mosaic.version = 11 : i64} {
  func.func @mha_fused_kernel(%arg0: i32, %arg1: memref<1x8x32xbf16, #tpu.memory_space<vmem>>, %arg2: memref<32x32xbf16, #tpu.memory_space<vmem>>, %arg3: memref<1x32xf32, #tpu.memory_space<vmem>>, %arg4: memref<1x32xf32, #tpu.memory_space<vmem>>, %arg5: memref<1x32xf32, #tpu.memory_space<vmem>>, %arg6: memref<32x96xbf16, #tpu.memory_space<vmem>>, %arg7: memref<1x96xf32, #tpu.memory_space<vmem>>, %arg8: memref<32x32xbf16, #tpu.memory_space<vmem>>, %arg9: memref<1x32xf32, #tpu.memory_space<vmem>>, %arg10: memref<1x32xf32, #tpu.memory_space<vmem>>, %arg11: memref<1x32xf32, #tpu.memory_space<vmem>>, %arg12: memref<1x8x32xbf16, #tpu.memory_space<vmem>>, %arg13: memref<8x96xbf16, #tpu.memory_space<vmem>>, %arg14: memref<8x32xbf16, #tpu.memory_space<vmem>>) attributes {dimension_semantics = [#tpu.dimension_semantics<parallel>], iteration_bounds = array<i64: 2>, scalar_prefetch = 0 : i64, scratch_operands = 2 : i64, tpu.core_type = #tpu.core_type<tc>, window_params = [{transform_indices = @transform_0, window_bounds = array<i64: 1, 8, 32>}, {pipeline_mode = #tpu.pipeline_mode<synchronous>, transform_indices = @transform_1, window_bounds = array<i64: 32, 32>}, {pipeline_mode = #tpu.pipeline_mode<synchronous>, transform_indices = @transform_2, window_bounds = array<i64: 1, 32>}, {pipeline_mode = #tpu.pipeline_mode<synchronous>, transform_indices = @transform_3, window_bounds = array<i64: 1, 32>}, {pipeline_mode = #tpu.pipeline_mode<synchronous>, transform_indices = @transform_4, window_bounds = array<i64: 1, 32>}, {pipeline_mode = #tpu.pipeline_mode<synchronous>, transform_indices = @transform_5, window_bounds = array<i64: 32, 96>}, {pipeline_mode = #tpu.pipeline_mode<synchronous>, transform_indices = @transform_6, window_bounds = array<i64: 1, 96>}, {pipeline_mode = #tpu.pipeline_mode<synchronous>, transform_indices = @transform_7, window_bounds = array<i64: 32, 32>}, {pipeline_mode = #tpu.pipeline_mode<synchronous>, transform_indices = @transform_8, window_bounds = array<i64: 1, 32>}, {pipeline_mode = #tpu.pipeline_mode<synchronous>, transform_indices = @transform_9, window_bounds = array<i64: 1, 32>}, {pipeline_mode = #tpu.pipeline_mode<synchronous>, transform_indices = @transform_10, window_bounds = array<i64: 1, 32>}, {transform_indices = @transform_11, window_bounds = array<i64: 1, 8, 32>}]} {
    %c0 = arith.constant 0 : index
    %c0_0 = arith.constant 0 : index
    %c0_1 = arith.constant 0 : index
    %0 = vector.load %arg1[%c0, %c0_0, %c0_1] : memref<1x8x32xbf16, #tpu.memory_space<vmem>>, vector<1x8x32xbf16>
    %1 = vector.shape_cast %0 : vector<1x8x32xbf16> to vector<8x32xbf16>
    %c0_2 = arith.constant 0 : index
    %c0_3 = arith.constant 0 : index
    %2 = vector.load %arg2[%c0_2, %c0_3] : memref<32x32xbf16, #tpu.memory_space<vmem>>, vector<32x32xbf16>
    %cst = arith.constant dense<0.000000e+00> : vector<8x32xf32>
    %3 = tpu.matmul %1, %2, %cst {dimension_numbers = #tpu.dot_dimension_numbers<[1], [0], [0], [1], [0, 0, 1, 1], [], []>} : vector<8x32xbf16>, vector<32x32xbf16>, vector<8x32xf32> -> vector<8x32xf32>
    %c0_4 = arith.constant 0 : index
    %c0_5 = arith.constant 0 : index
    %4 = vector.load %arg3[%c0_4, %c0_5] : memref<1x32xf32, #tpu.memory_space<vmem>>, vector<1x32xf32>
    %5 = vector.broadcast %4 : vector<1x32xf32> to vector<8x32xf32>
    %6 = arith.addf %3, %5 : vector<8x32xf32>
    %c0_6 = arith.constant 0 : index
    %c0_7 = arith.constant 0 : index
    %7 = vector.load %arg4[%c0_6, %c0_7] : memref<1x32xf32, #tpu.memory_space<vmem>>, vector<1x32xf32>
    %c0_8 = arith.constant 0 : index
    %c0_9 = arith.constant 0 : index
    %8 = vector.load %arg5[%c0_8, %c0_9] : memref<1x32xf32, #tpu.memory_space<vmem>>, vector<1x32xf32>
    %cst_10 = arith.constant dense<0.000000e+00> : vector<8xf32>
    %9 = vector.multi_reduction <add>, %6, %cst_10 [1] : vector<8x32xf32> to vector<8xf32>
    %10 = vector.shape_cast %9 : vector<8xf32> to vector<8x1xf32>
    %cst_11 = arith.constant 3.200000e+01 : f32
    %11 = vector.broadcast %cst_11 : f32 to vector<8x1xf32>
    %12 = arith.divf %10, %11 : vector<8x1xf32>
    %13 = vector.broadcast %12 : vector<8x1xf32> to vector<8x32xf32>
    %14 = arith.subf %6, %13 : vector<8x32xf32>
    %15 = arith.mulf %14, %14 : vector<8x32xf32>
    %cst_12 = arith.constant dense<0.000000e+00> : vector<8xf32>
    %16 = vector.multi_reduction <add>, %15, %cst_12 [1] : vector<8x32xf32> to vector<8xf32>
    %17 = vector.shape_cast %16 : vector<8xf32> to vector<8x1xf32>
    %cst_13 = arith.constant 3.200000e+01 : f32
    %18 = vector.broadcast %cst_13 : f32 to vector<8x1xf32>
    %19 = arith.divf %17, %18 : vector<8x1xf32>
    %cst_14 = arith.constant 9.99999974E-6 : f32
    %20 = vector.broadcast %cst_14 : f32 to vector<8x1xf32>
    %21 = arith.addf %19, %20 : vector<8x1xf32>
    %22 = math.rsqrt %21 : vector<8x1xf32>
    %23 = vector.broadcast %22 : vector<8x1xf32> to vector<8x32xf32>
    %24 = arith.mulf %14, %23 : vector<8x32xf32>
    %25 = vector.broadcast %7 : vector<1x32xf32> to vector<8x32xf32>
    %26 = arith.mulf %24, %25 : vector<8x32xf32>
    %27 = vector.broadcast %8 : vector<1x32xf32> to vector<8x32xf32>
    %28 = arith.addf %26, %27 : vector<8x32xf32>
    %29 = arith.truncf %28 : vector<8x32xf32> to vector<8x32xbf16>
    %c0_15 = arith.constant 0 : index
    %c0_16 = arith.constant 0 : index
    %30 = vector.load %arg6[%c0_15, %c0_16] : memref<32x96xbf16, #tpu.memory_space<vmem>>, vector<32x96xbf16>
    %cst_17 = arith.constant dense<0.000000e+00> : vector<8x96xf32>
    %31 = tpu.matmul %29, %30, %cst_17 {dimension_numbers = #tpu.dot_dimension_numbers<[1], [0], [0], [1], [0, 0, 1, 1], [], []>} : vector<8x32xbf16>, vector<32x96xbf16>, vector<8x96xf32> -> vector<8x96xf32>
    %c0_18 = arith.constant 0 : index
    %c0_19 = arith.constant 0 : index
    %32 = vector.load %arg7[%c0_18, %c0_19] : memref<1x96xf32, #tpu.memory_space<vmem>>, vector<1x96xf32>
    %33 = vector.broadcast %32 : vector<1x96xf32> to vector<8x96xf32>
    %34 = arith.addf %31, %33 : vector<8x96xf32>
    %35 = arith.truncf %34 : vector<8x96xf32> to vector<8x96xbf16>
    %c0_20 = arith.constant 0 : index
    %c0_21 = arith.constant 0 : index
    %36 = vector.load %arg13[%c0_20, %c0_21] : memref<8x96xbf16, #tpu.memory_space<vmem>>, vector<8x96xbf16>
    tpu.vector_store %arg13[%c0_20, %c0_21], %35 {strides = array<i32>} : memref<8x96xbf16, #tpu.memory_space<vmem>>, vector<8x96xbf16>,
    %c0_22 = arith.constant 0 : index
    %c0_23 = arith.constant 0 : index
    %37 = vector.load %arg13[%c0_22, %c0_23] : memref<8x96xbf16, #tpu.memory_space<vmem>>, vector<8x4xbf16>
    %c0_24 = arith.constant 0 : index
    %c32 = arith.constant 32 : index
    %38 = vector.load %arg13[%c0_24, %c32] : memref<8x96xbf16, #tpu.memory_space<vmem>>, vector<8x4xbf16>
    %c0_25 = arith.constant 0 : index
    %c64 = arith.constant 64 : index
    %39 = vector.load %arg13[%c0_25, %c64] : memref<8x96xbf16, #tpu.memory_space<vmem>>, vector<8x4xbf16>
    %cst_26 = arith.constant dense<0.000000e+00> : vector<8x8xf32>
    %40 = tpu.matmul %37, %38, %cst_26 {dimension_numbers = #tpu.dot_dimension_numbers<[1], [1], [0], [0], [0, 0, 1, 0], [], []>} : vector<8x4xbf16>, vector<8x4xbf16>, vector<8x8xf32> -> vector<8x8xf32>
    %cst_27 = arith.constant 5.000000e-01 : f32
    %41 = vector.broadcast %cst_27 : f32 to vector<8x8xf32>
    %42 = arith.mulf %40, %41 : vector<8x8xf32>
    %cst_28 = arith.constant dense<0xFF800000> : vector<8xf32>
    %43 = vector.multi_reduction <maximumf>, %42, %cst_28 [1] : vector<8x8xf32> to vector<8xf32>
    %44 = vector.shape_cast %43 : vector<8xf32> to vector<8x1xf32>
    %45 = vector.broadcast %44 : vector<8x1xf32> to vector<8x8xf32>
    %46 = arith.subf %42, %45 : vector<8x8xf32>
    %47 = math.exp %46 : vector<8x8xf32>
    %cst_29 = arith.constant dense<0.000000e+00> : vector<8xf32>
    %48 = vector.multi_reduction <add>, %47, %cst_29 [1] : vector<8x8xf32> to vector<8xf32>
    %49 = vector.shape_cast %48 : vector<8xf32> to vector<8x1xf32>
    %50 = vector.broadcast %49 : vector<8x1xf32> to vector<8x8xf32>
    %51 = arith.divf %47, %50 : vector<8x8xf32>
    %52 = arith.truncf %51 : vector<8x8xf32> to vector<8x8xbf16>
    %cst_30 = arith.constant dense<0.000000e+00> : vector<8x4xf32>
    %53 = tpu.matmul %52, %39, %cst_30 {dimension_numbers = #tpu.dot_dimension_numbers<[1], [0], [0], [1], [0, 0, 1, 1], [], []>} : vector<8x8xbf16>, vector<8x4xbf16>, vector<8x4xf32> -> vector<8x4xf32>
    %54 = arith.truncf %53 : vector<8x4xf32> to vector<8x4xbf16>
    %c0_31 = arith.constant 0 : index
    %c0_32 = arith.constant 0 : index
    %55 = vector.load %arg14[%c0_31, %c0_32] : memref<8x32xbf16, #tpu.memory_space<vmem>>, vector<8x4xbf16>
    tpu.vector_store %arg14[%c0_31, %c0_32], %54 {strides = array<i32>} : memref<8x32xbf16, #tpu.memory_space<vmem>>, vector<8x4xbf16>,
    %c0_33 = arith.constant 0 : index
    %c4 = arith.constant 4 : index
    %56 = vector.load %arg13[%c0_33, %c4] : memref<8x96xbf16, #tpu.memory_space<vmem>>, vector<8x4xbf16>
    %c0_34 = arith.constant 0 : index
    %c36 = arith.constant 36 : index
    %57 = vector.load %arg13[%c0_34, %c36] : memref<8x96xbf16, #tpu.memory_space<vmem>>, vector<8x4xbf16>
    %c0_35 = arith.constant 0 : index
    %c68 = arith.constant 68 : index
    %58 = vector.load %arg13[%c0_35, %c68] : memref<8x96xbf16, #tpu.memory_space<vmem>>, vector<8x4xbf16>
    %cst_36 = arith.constant dense<0.000000e+00> : vector<8x8xf32>
    %59 = tpu.matmul %56, %57, %cst_36 {dimension_numbers = #tpu.dot_dimension_numbers<[1], [1], [0], [0], [0, 0, 1, 0], [], []>} : vector<8x4xbf16>, vector<8x4xbf16>, vector<8x8xf32> -> vector<8x8xf32>
    %cst_37 = arith.constant 5.000000e-01 : f32
    %60 = vector.broadcast %cst_37 : f32 to vector<8x8xf32>
    %61 = arith.mulf %59, %60 : vector<8x8xf32>
    %cst_38 = arith.constant dense<0xFF800000> : vector<8xf32>
    %62 = vector.multi_reduction <maximumf>, %61, %cst_38 [1] : vector<8x8xf32> to vector<8xf32>
    %63 = vector.shape_cast %62 : vector<8xf32> to vector<8x1xf32>
    %64 = vector.broadcast %63 : vector<8x1xf32> to vector<8x8xf32>
    %65 = arith.subf %61, %64 : vector<8x8xf32>
    %66 = math.exp %65 : vector<8x8xf32>
    %cst_39 = arith.constant dense<0.000000e+00> : vector<8xf32>
    %67 = vector.multi_reduction <add>, %66, %cst_39 [1] : vector<8x8xf32> to vector<8xf32>
    %68 = vector.shape_cast %67 : vector<8xf32> to vector<8x1xf32>
    %69 = vector.broadcast %68 : vector<8x1xf32> to vector<8x8xf32>
    %70 = arith.divf %66, %69 : vector<8x8xf32>
    %71 = arith.truncf %70 : vector<8x8xf32> to vector<8x8xbf16>
    %cst_40 = arith.constant dense<0.000000e+00> : vector<8x4xf32>
    %72 = tpu.matmul %71, %58, %cst_40 {dimension_numbers = #tpu.dot_dimension_numbers<[1], [0], [0], [1], [0, 0, 1, 1], [], []>} : vector<8x8xbf16>, vector<8x4xbf16>, vector<8x4xf32> -> vector<8x4xf32>
    %73 = arith.truncf %72 : vector<8x4xf32> to vector<8x4xbf16>
    %c0_41 = arith.constant 0 : index
    %c4_42 = arith.constant 4 : index
    %74 = vector.load %arg14[%c0_41, %c4_42] : memref<8x32xbf16, #tpu.memory_space<vmem>>, vector<8x4xbf16>
    tpu.vector_store %arg14[%c0_41, %c4_42], %73 {strides = array<i32>} : memref<8x32xbf16, #tpu.memory_space<vmem>>, vector<8x4xbf16>,
    %c0_43 = arith.constant 0 : index
    %c8 = arith.constant 8 : index
    %75 = vector.load %arg13[%c0_43, %c8] : memref<8x96xbf16, #tpu.memory_space<vmem>>, vector<8x4xbf16>
    %c0_44 = arith.constant 0 : index
    %c40 = arith.constant 40 : index
    %76 = vector.load %arg13[%c0_44, %c40] : memref<8x96xbf16, #tpu.memory_space<vmem>>, vector<8x4xbf16>
    %c0_45 = arith.constant 0 : index
    %c72 = arith.constant 72 : index
    %77 = vector.load %arg13[%c0_45, %c72] : memref<8x96xbf16, #tpu.memory_space<vmem>>, vector<8x4xbf16>
    %cst_46 = arith.constant dense<0.000000e+00> : vector<8x8xf32>
    %78 = tpu.matmul %75, %76, %cst_46 {dimension_numbers = #tpu.dot_dimension_numbers<[1], [1], [0], [0], [0, 0, 1, 0], [], []>} : vector<8x4xbf16>, vector<8x4xbf16>, vector<8x8xf32> -> vector<8x8xf32>
    %cst_47 = arith.constant 5.000000e-01 : f32
    %79 = vector.broadcast %cst_47 : f32 to vector<8x8xf32>
    %80 = arith.mulf %78, %79 : vector<8x8xf32>
    %cst_48 = arith.constant dense<0xFF800000> : vector<8xf32>
    %81 = vector.multi_reduction <maximumf>, %80, %cst_48 [1] : vector<8x8xf32> to vector<8xf32>
    %82 = vector.shape_cast %81 : vector<8xf32> to vector<8x1xf32>
    %83 = vector.broadcast %82 : vector<8x1xf32> to vector<8x8xf32>
    %84 = arith.subf %80, %83 : vector<8x8xf32>
    %85 = math.exp %84 : vector<8x8xf32>
    %cst_49 = arith.constant dense<0.000000e+00> : vector<8xf32>
    %86 = vector.multi_reduction <add>, %85, %cst_49 [1] : vector<8x8xf32> to vector<8xf32>
    %87 = vector.shape_cast %86 : vector<8xf32> to vector<8x1xf32>
    %88 = vector.broadcast %87 : vector<8x1xf32> to vector<8x8xf32>
    %89 = arith.divf %85, %88 : vector<8x8xf32>
    %90 = arith.truncf %89 : vector<8x8xf32> to vector<8x8xbf16>
    %cst_50 = arith.constant dense<0.000000e+00> : vector<8x4xf32>
    %91 = tpu.matmul %90, %77, %cst_50 {dimension_numbers = #tpu.dot_dimension_numbers<[1], [0], [0], [1], [0, 0, 1, 1], [], []>} : vector<8x8xbf16>, vector<8x4xbf16>, vector<8x4xf32> -> vector<8x4xf32>
    %92 = arith.truncf %91 : vector<8x4xf32> to vector<8x4xbf16>
    %c0_51 = arith.constant 0 : index
    %c8_52 = arith.constant 8 : index
    %93 = vector.load %arg14[%c0_51, %c8_52] : memref<8x32xbf16, #tpu.memory_space<vmem>>, vector<8x4xbf16>
    tpu.vector_store %arg14[%c0_51, %c8_52], %92 {strides = array<i32>} : memref<8x32xbf16, #tpu.memory_space<vmem>>, vector<8x4xbf16>,
    %c0_53 = arith.constant 0 : index
    %c12 = arith.constant 12 : index
    %94 = vector.load %arg13[%c0_53, %c12] : memref<8x96xbf16, #tpu.memory_space<vmem>>, vector<8x4xbf16>
    %c0_54 = arith.constant 0 : index
    %c44 = arith.constant 44 : index
    %95 = vector.load %arg13[%c0_54, %c44] : memref<8x96xbf16, #tpu.memory_space<vmem>>, vector<8x4xbf16>
    %c0_55 = arith.constant 0 : index
    %c76 = arith.constant 76 : index
    %96 = vector.load %arg13[%c0_55, %c76] : memref<8x96xbf16, #tpu.memory_space<vmem>>, vector<8x4xbf16>
    %cst_56 = arith.constant dense<0.000000e+00> : vector<8x8xf32>
    %97 = tpu.matmul %94, %95, %cst_56 {dimension_numbers = #tpu.dot_dimension_numbers<[1], [1], [0], [0], [0, 0, 1, 0], [], []>} : vector<8x4xbf16>, vector<8x4xbf16>, vector<8x8xf32> -> vector<8x8xf32>
    %cst_57 = arith.constant 5.000000e-01 : f32
    %98 = vector.broadcast %cst_57 : f32 to vector<8x8xf32>
    %99 = arith.mulf %97, %98 : vector<8x8xf32>
    %cst_58 = arith.constant dense<0xFF800000> : vector<8xf32>
    %100 = vector.multi_reduction <maximumf>, %99, %cst_58 [1] : vector<8x8xf32> to vector<8xf32>
    %101 = vector.shape_cast %100 : vector<8xf32> to vector<8x1xf32>
    %102 = vector.broadcast %101 : vector<8x1xf32> to vector<8x8xf32>
    %103 = arith.subf %99, %102 : vector<8x8xf32>
    %104 = math.exp %103 : vector<8x8xf32>
    %cst_59 = arith.constant dense<0.000000e+00> : vector<8xf32>
    %105 = vector.multi_reduction <add>, %104, %cst_59 [1] : vector<8x8xf32> to vector<8xf32>
    %106 = vector.shape_cast %105 : vector<8xf32> to vector<8x1xf32>
    %107 = vector.broadcast %106 : vector<8x1xf32> to vector<8x8xf32>
    %108 = arith.divf %104, %107 : vector<8x8xf32>
    %109 = arith.truncf %108 : vector<8x8xf32> to vector<8x8xbf16>
    %cst_60 = arith.constant dense<0.000000e+00> : vector<8x4xf32>
    %110 = tpu.matmul %109, %96, %cst_60 {dimension_numbers = #tpu.dot_dimension_numbers<[1], [0], [0], [1], [0, 0, 1, 1], [], []>} : vector<8x8xbf16>, vector<8x4xbf16>, vector<8x4xf32> -> vector<8x4xf32>
    %111 = arith.truncf %110 : vector<8x4xf32> to vector<8x4xbf16>
    %c0_61 = arith.constant 0 : index
    %c12_62 = arith.constant 12 : index
    %112 = vector.load %arg14[%c0_61, %c12_62] : memref<8x32xbf16, #tpu.memory_space<vmem>>, vector<8x4xbf16>
    tpu.vector_store %arg14[%c0_61, %c12_62], %111 {strides = array<i32>} : memref<8x32xbf16, #tpu.memory_space<vmem>>, vector<8x4xbf16>,
    %c0_63 = arith.constant 0 : index
    %c16 = arith.constant 16 : index
    %113 = vector.load %arg13[%c0_63, %c16] : memref<8x96xbf16, #tpu.memory_space<vmem>>, vector<8x4xbf16>
    %c0_64 = arith.constant 0 : index
    %c48 = arith.constant 48 : index
    %114 = vector.load %arg13[%c0_64, %c48] : memref<8x96xbf16, #tpu.memory_space<vmem>>, vector<8x4xbf16>
    %c0_65 = arith.constant 0 : index
    %c80 = arith.constant 80 : index
    %115 = vector.load %arg13[%c0_65, %c80] : memref<8x96xbf16, #tpu.memory_space<vmem>>, vector<8x4xbf16>
    %cst_66 = arith.constant dense<0.000000e+00> : vector<8x8xf32>
    %116 = tpu.matmul %113, %114, %cst_66 {dimension_numbers = #tpu.dot_dimension_numbers<[1], [1], [0], [0], [0, 0, 1, 0], [], []>} : vector<8x4xbf16>, vector<8x4xbf16>, vector<8x8xf32> -> vector<8x8xf32>
    %cst_67 = arith.constant 5.000000e-01 : f32
    %117 = vector.broadcast %cst_67 : f32 to vector<8x8xf32>
    %118 = arith.mulf %116, %117 : vector<8x8xf32>
    %cst_68 = arith.constant dense<0xFF800000> : vector<8xf32>
    %119 = vector.multi_reduction <maximumf>, %118, %cst_68 [1] : vector<8x8xf32> to vector<8xf32>
    %120 = vector.shape_cast %119 : vector<8xf32> to vector<8x1xf32>
    %121 = vector.broadcast %120 : vector<8x1xf32> to vector<8x8xf32>
    %122 = arith.subf %118, %121 : vector<8x8xf32>
    %123 = math.exp %122 : vector<8x8xf32>
    %cst_69 = arith.constant dense<0.000000e+00> : vector<8xf32>
    %124 = vector.multi_reduction <add>, %123, %cst_69 [1] : vector<8x8xf32> to vector<8xf32>
    %125 = vector.shape_cast %124 : vector<8xf32> to vector<8x1xf32>
    %126 = vector.broadcast %125 : vector<8x1xf32> to vector<8x8xf32>
    %127 = arith.divf %123, %126 : vector<8x8xf32>
    %128 = arith.truncf %127 : vector<8x8xf32> to vector<8x8xbf16>
    %cst_70 = arith.constant dense<0.000000e+00> : vector<8x4xf32>
    %129 = tpu.matmul %128, %115, %cst_70 {dimension_numbers = #tpu.dot_dimension_numbers<[1], [0], [0], [1], [0, 0, 1, 1], [], []>} : vector<8x8xbf16>, vector<8x4xbf16>, vector<8x4xf32> -> vector<8x4xf32>
    %130 = arith.truncf %129 : vector<8x4xf32> to vector<8x4xbf16>
    %c0_71 = arith.constant 0 : index
    %c16_72 = arith.constant 16 : index
    %131 = vector.load %arg14[%c0_71, %c16_72] : memref<8x32xbf16, #tpu.memory_space<vmem>>, vector<8x4xbf16>
    tpu.vector_store %arg14[%c0_71, %c16_72], %130 {strides = array<i32>} : memref<8x32xbf16, #tpu.memory_space<vmem>>, vector<8x4xbf16>,
    %c0_73 = arith.constant 0 : index
    %c20 = arith.constant 20 : index
    %132 = vector.load %arg13[%c0_73, %c20] : memref<8x96xbf16, #tpu.memory_space<vmem>>, vector<8x4xbf16>
    %c0_74 = arith.constant 0 : index
    %c52 = arith.constant 52 : index
    %133 = vector.load %arg13[%c0_74, %c52] : memref<8x96xbf16, #tpu.memory_space<vmem>>, vector<8x4xbf16>
    %c0_75 = arith.constant 0 : index
    %c84 = arith.constant 84 : index
    %134 = vector.load %arg13[%c0_75, %c84] : memref<8x96xbf16, #tpu.memory_space<vmem>>, vector<8x4xbf16>
    %cst_76 = arith.constant dense<0.000000e+00> : vector<8x8xf32>
    %135 = tpu.matmul %132, %133, %cst_76 {dimension_numbers = #tpu.dot_dimension_numbers<[1], [1], [0], [0], [0, 0, 1, 0], [], []>} : vector<8x4xbf16>, vector<8x4xbf16>, vector<8x8xf32> -> vector<8x8xf32>
    %cst_77 = arith.constant 5.000000e-01 : f32
    %136 = vector.broadcast %cst_77 : f32 to vector<8x8xf32>
    %137 = arith.mulf %135, %136 : vector<8x8xf32>
    %cst_78 = arith.constant dense<0xFF800000> : vector<8xf32>
    %138 = vector.multi_reduction <maximumf>, %137, %cst_78 [1] : vector<8x8xf32> to vector<8xf32>
    %139 = vector.shape_cast %138 : vector<8xf32> to vector<8x1xf32>
    %140 = vector.broadcast %139 : vector<8x1xf32> to vector<8x8xf32>
    %141 = arith.subf %137, %140 : vector<8x8xf32>
    %142 = math.exp %141 : vector<8x8xf32>
    %cst_79 = arith.constant dense<0.000000e+00> : vector<8xf32>
    %143 = vector.multi_reduction <add>, %142, %cst_79 [1] : vector<8x8xf32> to vector<8xf32>
    %144 = vector.shape_cast %143 : vector<8xf32> to vector<8x1xf32>
    %145 = vector.broadcast %144 : vector<8x1xf32> to vector<8x8xf32>
    %146 = arith.divf %142, %145 : vector<8x8xf32>
    %147 = arith.truncf %146 : vector<8x8xf32> to vector<8x8xbf16>
    %cst_80 = arith.constant dense<0.000000e+00> : vector<8x4xf32>
    %148 = tpu.matmul %147, %134, %cst_80 {dimension_numbers = #tpu.dot_dimension_numbers<[1], [0], [0], [1], [0, 0, 1, 1], [], []>} : vector<8x8xbf16>, vector<8x4xbf16>, vector<8x4xf32> -> vector<8x4xf32>
    %149 = arith.truncf %148 : vector<8x4xf32> to vector<8x4xbf16>
    %c0_81 = arith.constant 0 : index
    %c20_82 = arith.constant 20 : index
    %150 = vector.load %arg14[%c0_81, %c20_82] : memref<8x32xbf16, #tpu.memory_space<vmem>>, vector<8x4xbf16>
    tpu.vector_store %arg14[%c0_81, %c20_82], %149 {strides = array<i32>} : memref<8x32xbf16, #tpu.memory_space<vmem>>, vector<8x4xbf16>,
    %c0_83 = arith.constant 0 : index
    %c24 = arith.constant 24 : index
    %151 = vector.load %arg13[%c0_83, %c24] : memref<8x96xbf16, #tpu.memory_space<vmem>>, vector<8x4xbf16>
    %c0_84 = arith.constant 0 : index
    %c56 = arith.constant 56 : index
    %152 = vector.load %arg13[%c0_84, %c56] : memref<8x96xbf16, #tpu.memory_space<vmem>>, vector<8x4xbf16>
    %c0_85 = arith.constant 0 : index
    %c88 = arith.constant 88 : index
    %153 = vector.load %arg13[%c0_85, %c88] : memref<8x96xbf16, #tpu.memory_space<vmem>>, vector<8x4xbf16>
    %cst_86 = arith.constant dense<0.000000e+00> : vector<8x8xf32>
    %154 = tpu.matmul %151, %152, %cst_86 {dimension_numbers = #tpu.dot_dimension_numbers<[1], [1], [0], [0], [0, 0, 1, 0], [], []>} : vector<8x4xbf16>, vector<8x4xbf16>, vector<8x8xf32> -> vector<8x8xf32>
    %cst_87 = arith.constant 5.000000e-01 : f32
    %155 = vector.broadcast %cst_87 : f32 to vector<8x8xf32>
    %156 = arith.mulf %154, %155 : vector<8x8xf32>
    %cst_88 = arith.constant dense<0xFF800000> : vector<8xf32>
    %157 = vector.multi_reduction <maximumf>, %156, %cst_88 [1] : vector<8x8xf32> to vector<8xf32>
    %158 = vector.shape_cast %157 : vector<8xf32> to vector<8x1xf32>
    %159 = vector.broadcast %158 : vector<8x1xf32> to vector<8x8xf32>
    %160 = arith.subf %156, %159 : vector<8x8xf32>
    %161 = math.exp %160 : vector<8x8xf32>
    %cst_89 = arith.constant dense<0.000000e+00> : vector<8xf32>
    %162 = vector.multi_reduction <add>, %161, %cst_89 [1] : vector<8x8xf32> to vector<8xf32>
    %163 = vector.shape_cast %162 : vector<8xf32> to vector<8x1xf32>
    %164 = vector.broadcast %163 : vector<8x1xf32> to vector<8x8xf32>
    %165 = arith.divf %161, %164 : vector<8x8xf32>
    %166 = arith.truncf %165 : vector<8x8xf32> to vector<8x8xbf16>
    %cst_90 = arith.constant dense<0.000000e+00> : vector<8x4xf32>
    %167 = tpu.matmul %166, %153, %cst_90 {dimension_numbers = #tpu.dot_dimension_numbers<[1], [0], [0], [1], [0, 0, 1, 1], [], []>} : vector<8x8xbf16>, vector<8x4xbf16>, vector<8x4xf32> -> vector<8x4xf32>
    %168 = arith.truncf %167 : vector<8x4xf32> to vector<8x4xbf16>
    %c0_91 = arith.constant 0 : index
    %c24_92 = arith.constant 24 : index
    %169 = vector.load %arg14[%c0_91, %c24_92] : memref<8x32xbf16, #tpu.memory_space<vmem>>, vector<8x4xbf16>
    tpu.vector_store %arg14[%c0_91, %c24_92], %168 {strides = array<i32>} : memref<8x32xbf16, #tpu.memory_space<vmem>>, vector<8x4xbf16>,
    %c0_93 = arith.constant 0 : index
    %c28 = arith.constant 28 : index
    %170 = vector.load %arg13[%c0_93, %c28] : memref<8x96xbf16, #tpu.memory_space<vmem>>, vector<8x4xbf16>
    %c0_94 = arith.constant 0 : index
    %c60 = arith.constant 60 : index
    %171 = vector.load %arg13[%c0_94, %c60] : memref<8x96xbf16, #tpu.memory_space<vmem>>, vector<8x4xbf16>
    %c0_95 = arith.constant 0 : index
    %c92 = arith.constant 92 : index
    %172 = vector.load %arg13[%c0_95, %c92] : memref<8x96xbf16, #tpu.memory_space<vmem>>, vector<8x4xbf16>
    %cst_96 = arith.constant dense<0.000000e+00> : vector<8x8xf32>
    %173 = tpu.matmul %170, %171, %cst_96 {dimension_numbers = #tpu.dot_dimension_numbers<[1], [1], [0], [0], [0, 0, 1, 0], [], []>} : vector<8x4xbf16>, vector<8x4xbf16>, vector<8x8xf32> -> vector<8x8xf32>
    %cst_97 = arith.constant 5.000000e-01 : f32
    %174 = vector.broadcast %cst_97 : f32 to vector<8x8xf32>
    %175 = arith.mulf %173, %174 : vector<8x8xf32>
    %cst_98 = arith.constant dense<0xFF800000> : vector<8xf32>
    %176 = vector.multi_reduction <maximumf>, %175, %cst_98 [1] : vector<8x8xf32> to vector<8xf32>
    %177 = vector.shape_cast %176 : vector<8xf32> to vector<8x1xf32>
    %178 = vector.broadcast %177 : vector<8x1xf32> to vector<8x8xf32>
    %179 = arith.subf %175, %178 : vector<8x8xf32>
    %180 = math.exp %179 : vector<8x8xf32>
    %cst_99 = arith.constant dense<0.000000e+00> : vector<8xf32>
    %181 = vector.multi_reduction <add>, %180, %cst_99 [1] : vector<8x8xf32> to vector<8xf32>
    %182 = vector.shape_cast %181 : vector<8xf32> to vector<8x1xf32>
    %183 = vector.broadcast %182 : vector<8x1xf32> to vector<8x8xf32>
    %184 = arith.divf %180, %183 : vector<8x8xf32>
    %185 = arith.truncf %184 : vector<8x8xf32> to vector<8x8xbf16>
    %cst_100 = arith.constant dense<0.000000e+00> : vector<8x4xf32>
    %186 = tpu.matmul %185, %172, %cst_100 {dimension_numbers = #tpu.dot_dimension_numbers<[1], [0], [0], [1], [0, 0, 1, 1], [], []>} : vector<8x8xbf16>, vector<8x4xbf16>, vector<8x4xf32> -> vector<8x4xf32>
    %187 = arith.truncf %186 : vector<8x4xf32> to vector<8x4xbf16>
    %c0_101 = arith.constant 0 : index
    %c28_102 = arith.constant 28 : index
    %188 = vector.load %arg14[%c0_101, %c28_102] : memref<8x32xbf16, #tpu.memory_space<vmem>>, vector<8x4xbf16>
    tpu.vector_store %arg14[%c0_101, %c28_102], %187 {strides = array<i32>} : memref<8x32xbf16, #tpu.memory_space<vmem>>, vector<8x4xbf16>,
    %c0_103 = arith.constant 0 : index
    %c0_104 = arith.constant 0 : index
    %189 = vector.load %arg14[%c0_103, %c0_104] : memref<8x32xbf16, #tpu.memory_space<vmem>>, vector<8x32xbf16>
    %c0_105 = arith.constant 0 : index
    %c0_106 = arith.constant 0 : index
    %190 = vector.load %arg8[%c0_105, %c0_106] : memref<32x32xbf16, #tpu.memory_space<vmem>>, vector<32x32xbf16>
    %cst_107 = arith.constant dense<0.000000e+00> : vector<8x32xf32>
    %191 = tpu.matmul %189, %190, %cst_107 {dimension_numbers = #tpu.dot_dimension_numbers<[1], [0], [0], [1], [0, 0, 1, 1], [], []>} : vector<8x32xbf16>, vector<32x32xbf16>, vector<8x32xf32> -> vector<8x32xf32>
    %c0_108 = arith.constant 0 : index
    %c0_109 = arith.constant 0 : index
    %192 = vector.load %arg9[%c0_108, %c0_109] : memref<1x32xf32, #tpu.memory_space<vmem>>, vector<1x32xf32>
    %193 = vector.broadcast %192 : vector<1x32xf32> to vector<8x32xf32>
    %194 = arith.addf %191, %193 : vector<8x32xf32>
    %195 = arith.addf %28, %194 : vector<8x32xf32>
    %c0_110 = arith.constant 0 : index
    %c0_111 = arith.constant 0 : index
    %196 = vector.load %arg10[%c0_110, %c0_111] : memref<1x32xf32, #tpu.memory_space<vmem>>, vector<1x32xf32>
    %c0_112 = arith.constant 0 : index
    %c0_113 = arith.constant 0 : index
    %197 = vector.load %arg11[%c0_112, %c0_113] : memref<1x32xf32, #tpu.memory_space<vmem>>, vector<1x32xf32>
    %cst_114 = arith.constant dense<0.000000e+00> : vector<8xf32>
    %198 = vector.multi_reduction <add>, %195, %cst_114 [1] : vector<8x32xf32> to vector<8xf32>
    %199 = vector.shape_cast %198 : vector<8xf32> to vector<8x1xf32>
    %cst_115 = arith.constant 3.200000e+01 : f32
    %200 = vector.broadcast %cst_115 : f32 to vector<8x1xf32>
    %201 = arith.divf %199, %200 : vector<8x1xf32>
    %202 = vector.broadcast %201 : vector<8x1xf32> to vector<8x32xf32>
    %203 = arith.subf %195, %202 : vector<8x32xf32>
    %204 = arith.mulf %203, %203 : vector<8x32xf32>
    %cst_116 = arith.constant dense<0.000000e+00> : vector<8xf32>
    %205 = vector.multi_reduction <add>, %204, %cst_116 [1] : vector<8x32xf32> to vector<8xf32>
    %206 = vector.shape_cast %205 : vector<8xf32> to vector<8x1xf32>
    %cst_117 = arith.constant 3.200000e+01 : f32
    %207 = vector.broadcast %cst_117 : f32 to vector<8x1xf32>
    %208 = arith.divf %206, %207 : vector<8x1xf32>
    %cst_118 = arith.constant 9.99999974E-6 : f32
    %209 = vector.broadcast %cst_118 : f32 to vector<8x1xf32>
    %210 = arith.addf %208, %209 : vector<8x1xf32>
    %211 = math.rsqrt %210 : vector<8x1xf32>
    %212 = vector.broadcast %211 : vector<8x1xf32> to vector<8x32xf32>
    %213 = arith.mulf %203, %212 : vector<8x32xf32>
    %214 = vector.broadcast %196 : vector<1x32xf32> to vector<8x32xf32>
    %215 = arith.mulf %213, %214 : vector<8x32xf32>
    %216 = vector.broadcast %197 : vector<1x32xf32> to vector<8x32xf32>
    %217 = arith.addf %215, %216 : vector<8x32xf32>
    %218 = arith.truncf %217 : vector<8x32xf32> to vector<8x32xbf16>
    %c0_119 = arith.constant 0 : index
    %c0_120 = arith.constant 0 : index
    %c0_121 = arith.constant 0 : index
    %219 = vector.load %arg12[%c0_119, %c0_120, %c0_121] : memref<1x8x32xbf16, #tpu.memory_space<vmem>>, vector<1x8x32xbf16>
    %220 = vector.shape_cast %219 : vector<1x8x32xbf16> to vector<8x32xbf16>
    %221 = vector.shape_cast %218 : vector<8x32xbf16> to vector<1x8x32xbf16>
    tpu.vector_store %arg12[%c0_119, %c0_120, %c0_121], %221 {strides = array<i32>} : memref<1x8x32xbf16, #tpu.memory_space<vmem>>, vector<1x8x32xbf16>,
    return
  }
  func.func @transform_0(%arg0: i32) -> (i32, i32, i32) {
    %c0_i32 = arith.constant 0 : i32
    %c0_i32_0 = arith.constant 0 : i32
    %c0_i32_1 = arith.constant 0 : i32
    return %arg0, %c0_i32, %c0_i32_0 : i32, i32, i32
  }
  func.func @transform_1(%arg0: i32) -> (i32, i32) {
    %c0_i32 = arith.constant 0 : i32
    %c0_i32_0 = arith.constant 0 : i32
    %c0_i32_1 = arith.constant 0 : i32
    return %c0_i32, %c0_i32_0 : i32, i32
  }
  func.func @transform_2(%arg0: i32) -> (i32, i32) {
    %c0_i32 = arith.constant 0 : i32
    %c0_i32_0 = arith.constant 0 : i32
    %c0_i32_1 = arith.constant 0 : i32
    return %c0_i32, %c0_i32_0 : i32, i32
  }
  func.func @transform_3(%arg0: i32) -> (i32, i32) {
    %c0_i32 = arith.constant 0 : i32
    %c0_i32_0 = arith.constant 0 : i32
    %c0_i32_1 = arith.constant 0 : i32
    return %c0_i32, %c0_i32_0 : i32, i32
  }
  func.func @transform_4(%arg0: i32) -> (i32, i32) {
    %c0_i32 = arith.constant 0 : i32
    %c0_i32_0 = arith.constant 0 : i32
    %c0_i32_1 = arith.constant 0 : i32
    return %c0_i32, %c0_i32_0 : i32, i32
  }
  func.func @transform_5(%arg0: i32) -> (i32, i32) {
    %c0_i32 = arith.constant 0 : i32
    %c0_i32_0 = arith.constant 0 : i32
    %c0_i32_1 = arith.constant 0 : i32
    return %c0_i32, %c0_i32_0 : i32, i32
  }
  func.func @transform_6(%arg0: i32) -> (i32, i32) {
    %c0_i32 = arith.constant 0 : i32
    %c0_i32_0 = arith.constant 0 : i32
    %c0_i32_1 = arith.constant 0 : i32
    return %c0_i32, %c0_i32_0 : i32, i32
  }
  func.func @transform_7(%arg0: i32) -> (i32, i32) {
    %c0_i32 = arith.constant 0 : i32
    %c0_i32_0 = arith.constant 0 : i32
    %c0_i32_1 = arith.constant 0 : i32
    return %c0_i32, %c0_i32_0 : i32, i32
  }
  func.func @transform_8(%arg0: i32) -> (i32, i32) {
    %c0_i32 = arith.constant 0 : i32
    %c0_i32_0 = arith.constant 0 : i32
    %c0_i32_1 = arith.constant 0 : i32
    return %c0_i32, %c0_i32_0 : i32, i32
  }
  func.func @transform_9(%arg0: i32) -> (i32, i32) {
    %c0_i32 = arith.constant 0 : i32
    %c0_i32_0 = arith.constant 0 : i32
    %c0_i32_1 = arith.constant 0 : i32
    return %c0_i32, %c0_i32_0 : i32, i32
  }
  func.func @transform_10(%arg0: i32) -> (i32, i32) {
    %c0_i32 = arith.constant 0 : i32
    %c0_i32_0 = arith.constant 0 : i32
    %c0_i32_1 = arith.constant 0 : i32
    return %c0_i32, %c0_i32_0 : i32, i32
  }
  func.func @transform_11(%arg0: i32) -> (i32, i32, i32) {
    %c0_i32 = arith.constant 0 : i32
    %c0_i32_0 = arith.constant 0 : i32
    %c0_i32_1 = arith.constant 0 : i32
    return %arg0, %c0_i32, %c0_i32_0 : i32, i32, i32
  }
}

</mosaic_0001>

<llo_original>
// kernel: tpu_custom_call.1
$region0: #{tpu_custom_call.1}
  #allocation0 [shape = 'u32[]', space=smem, size = 0x4, offset = 0x4, fixed_abs, tag = 'smem constant byte address 0x4 - core index']
  #allocation1 [shape = 'u32[144,128]{1,0:T(1,128)}', space=vmem, size = 0x12000, scoped, tag = 'internal scratch']
  #allocation2 [shape = 'bf16[8,96]{1,0:T(8,128)(2,1)}', space=vmem, size = 0x800, scoped, tag = 'scratch operand']
  #allocation3 [shape = 'bf16[8,32]{1,0:T(8,128)(2,1)}', space=vmem, size = 0x800, scoped, tag = 'scratch operand']
  %s0 = inlined_call_operand.hbm [shape: bf16[2,8,32], index: 0, kind: input, shape index: {}]
  %s1 = inlined_call_operand.hbm [shape: bf16[32,32], index: 1, kind: input, shape index: {}]
  %s2 = inlined_call_operand.vmem [shape: f32[1,32], index: 2, kind: input, shape index: {}]
  %s3 = inlined_call_operand.vmem [shape: f32[1,32], index: 3, kind: input, shape index: {}]
  %s4 = inlined_call_operand.vmem [shape: f32[1,32], index: 4, kind: input, shape index: {}]
  %s5 = inlined_call_operand.hbm [shape: bf16[32,96], index: 5, kind: input, shape index: {}]
  %s6 = inlined_call_operand.vmem [shape: f32[1,96], index: 6, kind: input, shape index: {}]
  %s7 = inlined_call_operand.hbm [shape: bf16[32,32], index: 7, kind: input, shape index: {}]
  %s8 = inlined_call_operand.vmem [shape: f32[1,32], index: 8, kind: input, shape index: {}]
  %s9 = inlined_call_operand.vmem [shape: f32[1,32], index: 9, kind: input, shape index: {}]
  %s10 = inlined_call_operand.vmem [shape: f32[1,32], index: 10, kind: input, shape index: {}]
  %s11 = inlined_call_operand.hbm [shape: bf16[2,8,32], index: 11, kind: output, shape index: {}]
  %s12 = sld [smem:[#allocation0]]
  $region93: #{tpu_custom_call.1} parent=0
    _
  %s14 = ssub.s32 1, %s12
  %s15 = scalar_select 0, %s14, %s12
  $region1: #{tpu_custom_call.1} parent=0
    #allocation4 [shape = 'u8[4096]{0}', space=vmem, size = 0x1000, scoped, tag = 'input window, operand 0']
    #allocation5 [shape = 's32[2]{0}', space=sflag, size = 0x8, scoped, tag = 'scoped memory for tpu_custom_call.1']
    #allocation6 [shape = 's32[2]{0}', space=sflag, size = 0x8, scoped, tag = 'scoped memory for tpu_custom_call.1']
    #allocation7 [shape = 'u8[8192]{0}', space=vmem, size = 0x2000, scoped, tag = 'input window, operand 1, single buffered']
    #allocation8 [shape = 's32[1]{0}', space=sflag, size = 0x4, scoped, tag = 'scoped memory for tpu_custom_call.1']
    #allocation9 [shape = 'u8[8192]{0}', space=vmem, size = 0x2000, scoped, tag = 'input window, operand 5, single buffered']
    #allocation10 [shape = 'u8[8192]{0}', space=vmem, size = 0x2000, scoped, tag = 'input window, operand 7, single buffered']
    #allocation11 [shape = 's32[1]{0}', space=sflag, size = 0x4, scoped, tag = 'scoped memory for tpu_custom_call.1']
    #allocation12 [shape = 'u8[4096]{0}', space=vmem, size = 0x1000, scoped, tag = 'output window, operand 0']
    %16 = vsyncpa [#allocation5], 0
    %s17 = scalar_lea.sflag [#allocation5], 1
    %18 = vsyncpa %s17, 0
    %19 = vsyncpa [#allocation8], 0
    %20 = vsyncpa [#allocation11], 0
    %21 = vsyncpa [#allocation6], 0
    %s22 = scalar_lea.sflag [#allocation6], 1
    %23 = vsyncpa %s22, 0
    loop: start=0, step=1, limit=4
    $region2: #{tpu_custom_call.1} parent=1 // loop_pre_header
      _
    $region3: #{tpu_custom_call.1} parent=1 // loop_header
      %s25 = sphi 0, %s29
      %p26 = scmp.ge.s32.totalorder %s25, 4
      %s35 = sphi 0, %s37
      %s38 = sphi 0, %s35
      %s39 = sphi 0, %s38
      %s55 = sphi 0, %s39
      %s59 = sphi 0, %s59
      %s61 = sphi 0, %s59
      %s62 = sphi 0, %s61
      %s76 = sphi 0, %s62
      %s80 = sphi 0, %s80
      %s82 = sphi 0, %s80
      %s83 = sphi 0, %s82
      %s97 = sphi 0, %s83
      %s101 = sphi 0, %s101
      %s103 = sphi 0, %s101
      %s104 = sphi 0, %s103
      %s118 = sphi 0, %s104
      %s122 = sphi 0, %s122
      %s124 = sphi 0, %s122
      %s125 = sphi 0, %s124
      %s139 = sphi 0, %s125
      %s143 = sphi 0, %s143
      %s145 = sphi 0, %s143
      %s146 = sphi 0, %s145
      %s160 = sphi 0, %s146
      %s164 = sphi 0, %s164
      %s166 = sphi 0, %s164
      %s167 = sphi 0, %s166
      %s181 = sphi 0, %s167
      %s185 = sphi 0, %s185
      %s187 = sphi 0, %s185
      %s188 = sphi 0, %s187
      %s202 = sphi 0, %s188
      %s206 = sphi 0, %s206
      %s208 = sphi 0, %s206
      %s209 = sphi 0, %s208
      %s223 = sphi 0, %s209
      %s227 = sphi 0, %s227
      %s229 = sphi 0, %s227
      %s230 = sphi 0, %s229
      %s244 = sphi 0, %s230
      %s248 = sphi 0, %s248
      %s250 = sphi 0, %s248
      %s251 = sphi 0, %s250
      %s265 = sphi 0, %s251
      %s271 = sphi 0, %s273
      %s274 = sphi 0, %s271
      %s275 = sphi 0, %s274
      %s291 = sphi 0, %s275
    $region4: #{tpu_custom_call.1} parent=1 // loop_header_branch
      %28 = sbr.rel (%p26) target = $region8
    $region5: #{tpu_custom_call.1} parent=1 // loop_body
      %s30 = ssub.s32 %s25, 1
      %s31 = ssub.s32 %s25, 2
      %s32 = sadd.s32 %s25, 1
      %s33 = ssub.s32 %s25, %s32
      %p34 = scmp.eq.s32.totalorder %s33, 0
      %s36 = sadd.s32 %s35, 1
      %s37 = scalar_select %p34, %s35, %s36
      %p40 = pneg %p34
      %p41 = scmp.eq.s32.totalorder %s25, 1
      %p42 = por %p40, %p41
      %p43 = scmp.ne.s32.totalorder %s35, %s38
      %p44 = scmp.eq.s32.totalorder %s25, 0
      %p45 = por %p43, %p44
      %p46 = scmp.ne.s32.totalorder %s35, %s38
      %p47 = scmp.eq.s32.totalorder %s30, 1
      %p48 = por %p46, %p47
      %p49 = scmp.ne.s32.totalorder %s38, %s39
      %p50 = scmp.eq.s32.totalorder %s30, 0
      %p51 = por %p49, %p50
      %p52 = scmp.ne.s32.totalorder %s38, %s39
      %p53 = scmp.eq.s32.totalorder %s31, 1
      %p54 = por %p52, %p53
      %p56 = scmp.ne.s32.totalorder %s39, %s55
      %p57 = scmp.eq.s32.totalorder %s31, 0
      %p58 = por %p56, %p57
      %s60 = sadd.s32 %s59, 1
      %p63 = scmp.eq.s32.totalorder %s25, 1
      %p64 = scmp.ne.s32.totalorder %s59, %s61
      %p65 = scmp.eq.s32.totalorder %s25, 0
      %p66 = por %p64, %p65
      %p67 = scmp.ne.s32.totalorder %s59, %s61
      %p68 = scmp.eq.s32.totalorder %s30, 1
      %p69 = por %p67, %p68
      %p70 = scmp.ne.s32.totalorder %s61, %s62
      %p71 = scmp.eq.s32.totalorder %s30, 0
      %p72 = por %p70, %p71
      %p73 = scmp.ne.s32.totalorder %s61, %s62
      %p74 = scmp.eq.s32.totalorder %s31, 1
      %p75 = por %p73, %p74
      %p77 = scmp.ne.s32.totalorder %s62, %s76
      %p78 = scmp.eq.s32.totalorder %s31, 0
      %p79 = por %p77, %p78
      %s81 = sadd.s32 %s80, 1
      %p84 = scmp.eq.s32.totalorder %s25, 1
      %p85 = scmp.ne.s32.totalorder %s80, %s82
      %p86 = scmp.eq.s32.totalorder %s25, 0
      %p87 = por %p85, %p86
      %p88 = scmp.ne.s32.totalorder %s80, %s82
      %p89 = scmp.eq.s32.totalorder %s30, 1
      %p90 = por %p88, %p89
      %p91 = scmp.ne.s32.totalorder %s82, %s83
      %p92 = scmp.eq.s32.totalorder %s30, 0
      %p93 = por %p91, %p92
      %p94 = scmp.ne.s32.totalorder %s82, %s83
      %p95 = scmp.eq.s32.totalorder %s31, 1
      %p96 = por %p94, %p95
      %p98 = scmp.ne.s32.totalorder %s83, %s97
      %p99 = scmp.eq.s32.totalorder %s31, 0
      %p100 = por %p98, %p99
      %s102 = sadd.s32 %s101, 1
      %p105 = scmp.eq.s32.totalorder %s25, 1
      %p106 = scmp.ne.s32.totalorder %s101, %s103
      %p107 = scmp.eq.s32.totalorder %s25, 0
      %p108 = por %p106, %p107
      %p109 = scmp.ne.s32.totalorder %s101, %s103
      %p110 = scmp.eq.s32.totalorder %s30, 1
      %p111 = por %p109, %p110
      %p112 = scmp.ne.s32.totalorder %s103, %s104
      %p113 = scmp.eq.s32.totalorder %s30, 0
      %p114 = por %p112, %p113
      %p115 = scmp.ne.s32.totalorder %s103, %s104
      %p116 = scmp.eq.s32.totalorder %s31, 1
      %p117 = por %p115, %p116
      %p119 = scmp.ne.s32.totalorder %s104, %s118
      %p120 = scmp.eq.s32.totalorder %s31, 0
      %p121 = por %p119, %p120
      %s123 = sadd.s32 %s122, 1
      %p126 = scmp.eq.s32.totalorder %s25, 1
      %p127 = scmp.ne.s32.totalorder %s122, %s124
      %p128 = scmp.eq.s32.totalorder %s25, 0
      %p129 = por %p127, %p128
      %p130 = scmp.ne.s32.totalorder %s122, %s124
      %p131 = scmp.eq.s32.totalorder %s30, 1
      %p132 = por %p130, %p131
      %p133 = scmp.ne.s32.totalorder %s124, %s125
      %p134 = scmp.eq.s32.totalorder %s30, 0
      %p135 = por %p133, %p134
      %p136 = scmp.ne.s32.totalorder %s124, %s125
      %p137 = scmp.eq.s32.totalorder %s31, 1
      %p138 = por %p136, %p137
      %p140 = scmp.ne.s32.totalorder %s125, %s139
      %p141 = scmp.eq.s32.totalorder %s31, 0
      %p142 = por %p140, %p141
      %s144 = sadd.s32 %s143, 1
      %p147 = scmp.eq.s32.totalorder %s25, 1
      %p148 = scmp.ne.s32.totalorder %s143, %s145
      %p149 = scmp.eq.s32.totalorder %s25, 0
      %p150 = por %p148, %p149
      %p151 = scmp.ne.s32.totalorder %s143, %s145
      %p152 = scmp.eq.s32.totalorder %s30, 1
      %p153 = por %p151, %p152
      %p154 = scmp.ne.s32.totalorder %s145, %s146
      %p155 = scmp.eq.s32.totalorder %s30, 0
      %p156 = por %p154, %p155
      %p157 = scmp.ne.s32.totalorder %s145, %s146
      %p158 = scmp.eq.s32.totalorder %s31, 1
      %p159 = por %p157, %p158
      %p161 = scmp.ne.s32.totalorder %s146, %s160
      %p162 = scmp.eq.s32.totalorder %s31, 0
      %p163 = por %p161, %p162
      %s165 = sadd.s32 %s164, 1
      %p168 = scmp.eq.s32.totalorder %s25, 1
      %p169 = scmp.ne.s32.totalorder %s164, %s166
      %p170 = scmp.eq.s32.totalorder %s25, 0
      %p171 = por %p169, %p170
      %p172 = scmp.ne.s32.totalorder %s164, %s166
      %p173 = scmp.eq.s32.totalorder %s30, 1
      %p174 = por %p172, %p173
      %p175 = scmp.ne.s32.totalorder %s166, %s167
      %p176 = scmp.eq.s32.totalorder %s30, 0
      %p177 = por %p175, %p176
      %p178 = scmp.ne.s32.totalorder %s166, %s167
      %p179 = scmp.eq.s32.totalorder %s31, 1
      %p180 = por %p178, %p179
      %p182 = scmp.ne.s32.totalorder %s167, %s181
      %p183 = scmp.eq.s32.totalorder %s31, 0
      %p184 = por %p182, %p183
      %s186 = sadd.s32 %s185, 1
      %p189 = scmp.eq.s32.totalorder %s25, 1
      %p190 = scmp.ne.s32.totalorder %s185, %s187
      %p191 = scmp.eq.s32.totalorder %s25, 0
      %p192 = por %p190, %p191
      %p193 = scmp.ne.s32.totalorder %s185, %s187
      %p194 = scmp.eq.s32.totalorder %s30, 1
      %p195 = por %p193, %p194
      %p196 = scmp.ne.s32.totalorder %s187, %s188
      %p197 = scmp.eq.s32.totalorder %s30, 0
      %p198 = por %p196, %p197
      %p199 = scmp.ne.s32.totalorder %s187, %s188
      %p200 = scmp.eq.s32.totalorder %s31, 1
      %p201 = por %p199, %p200
      %p203 = scmp.ne.s32.totalorder %s188, %s202
      %p204 = scmp.eq.s32.totalorder %s31, 0
      %p205 = por %p203, %p204
      %s207 = sadd.s32 %s206, 1
      %p210 = scmp.eq.s32.totalorder %s25, 1
      %p211 = scmp.ne.s32.totalorder %s206, %s208
      %p212 = scmp.eq.s32.totalorder %s25, 0
      %p213 = por %p211, %p212
      %p214 = scmp.ne.s32.totalorder %s206, %s208
      %p215 = scmp.eq.s32.totalorder %s30, 1
      %p216 = por %p214, %p215
      %p217 = scmp.ne.s32.totalorder %s208, %s209
      %p218 = scmp.eq.s32.totalorder %s30, 0
      %p219 = por %p217, %p218
      %p220 = scmp.ne.s32.totalorder %s208, %s209
      %p221 = scmp.eq.s32.totalorder %s31, 1
      %p222 = por %p220, %p221
      %p224 = scmp.ne.s32.totalorder %s209, %s223
      %p225 = scmp.eq.s32.totalorder %s31, 0
      %p226 = por %p224, %p225
      %s228 = sadd.s32 %s227, 1
      %p231 = scmp.eq.s32.totalorder %s25, 1
      %p232 = scmp.ne.s32.totalorder %s227, %s229
      %p233 = scmp.eq.s32.totalorder %s25, 0
      %p234 = por %p232, %p233
      %p235 = scmp.ne.s32.totalorder %s227, %s229
      %p236 = scmp.eq.s32.totalorder %s30, 1
      %p237 = por %p235, %p236
      %p238 = scmp.ne.s32.totalorder %s229, %s230
      %p239 = scmp.eq.s32.totalorder %s30, 0
      %p240 = por %p238, %p239
      %p241 = scmp.ne.s32.totalorder %s229, %s230
      %p242 = scmp.eq.s32.totalorder %s31, 1
      %p243 = por %p241, %p242
      %p245 = scmp.ne.s32.totalorder %s230, %s244
      %p246 = scmp.eq.s32.totalorder %s31, 0
      %p247 = por %p245, %p246
      %s249 = sadd.s32 %s248, 1
      %p252 = scmp.eq.s32.totalorder %s25, 1
      %p253 = scmp.ne.s32.totalorder %s248, %s250
      %p254 = scmp.eq.s32.totalorder %s25, 0
      %p255 = por %p253, %p254
      %p256 = scmp.ne.s32.totalorder %s248, %s250
      %p257 = scmp.eq.s32.totalorder %s30, 1
      %p258 = por %p256, %p257
      %p259 = scmp.ne.s32.totalorder %s250, %s251
      %p260 = scmp.eq.s32.totalorder %s30, 0
      %p261 = por %p259, %p260
      %p262 = scmp.ne.s32.totalorder %s250, %s251
      %p263 = scmp.eq.s32.totalorder %s31, 1
      %p264 = por %p262, %p263
      %p266 = scmp.ne.s32.totalorder %s251, %s265
      %p267 = scmp.eq.s32.totalorder %s31, 0
      %p268 = por %p266, %p267
      %s269 = ssub.s32 %s25, %s32
      %p270 = scmp.eq.s32.totalorder %s269, 0
      %s272 = sadd.s32 %s271, 1
      %s273 = scalar_select %p270, %s271, %s272
      %p276 = pneg %p270
      %p277 = scmp.eq.s32.totalorder %s25, 1
      %p278 = por %p276, %p277
      %p279 = scmp.ne.s32.totalorder %s271, %s274
      %p280 = scmp.eq.s32.totalorder %s25, 0
      %p281 = por %p279, %p280
      %p282 = scmp.ne.s32.totalorder %s271, %s274
      %p283 = scmp.eq.s32.totalorder %s30, 1
      %p284 = por %p282, %p283
      %p285 = scmp.ne.s32.totalorder %s274, %s275
      %p286 = scmp.eq.s32.totalorder %s30, 0
      %p287 = por %p285, %p286
      %p288 = scmp.ne.s32.totalorder %s274, %s275
      %p289 = scmp.eq.s32.totalorder %s31, 1
      %p290 = por %p288, %p289
      %p292 = scmp.ne.s32.totalorder %s275, %s291
      %p293 = scmp.eq.s32.totalorder %s31, 0
      %p294 = por %p292, %p293
      %p295 = scmp.le.s32.totalorder 1, %s25
      %p296 = scmp.lt.s32.totalorder %s25, 3
      %p297 = pnand %p295, %p296
      %p298 = pneg %p297
      // Predicated region
      $region9: #{tpu_custom_call.1} parent=5 // pred_check
        _
      $region10: #{tpu_custom_call.1} parent=5 // pred_check_branch
        %300 = sbr.rel (%p297) target = $region12
      $region11: #{tpu_custom_call.1} parent=5 // pred_region
        %s301 = ssub.s32 %s25, 1
        // Predicated region
        $region13: #{tpu_custom_call.1} parent=11 // pred_check
          %p302 = pneg %p72
        $region14: #{tpu_custom_call.1} parent=11 // pred_check_branch
          %304 = sbr.rel (%p302) target = $region16
        $region15: #{tpu_custom_call.1} parent=11 // pred_region
          %s306 = ssub.s32 256, 256
          %307 = vsyncadd [#allocation8], %s306
          %s308 = sshll.u32 [#allocation7], 4
          %s309 = int_to_ptr.vmem [resolvable:$true] %s308
          %314 = dma.hbm_to_vmem [thread:$0]  %s1, 256, %s309, [#allocation8], 64, 64, 4
        $region16: #{tpu_custom_call.1} parent=11 // pred_fallthru
          _
        // Predicated region
        $region17: #{tpu_custom_call.1} parent=11 // pred_check
          %p315 = pneg %p93
        $region18: #{tpu_custom_call.1} parent=11 // pred_check_branch
          %317 = sbr.rel (%p315) target = $region20
        $region19: #{tpu_custom_call.1} parent=11 // pred_region
          _
        $region20: #{tpu_custom_call.1} parent=11 // pred_fallthru
          _
        // Predicated region
        $region21: #{tpu_custom_call.1} parent=11 // pred_check
          %p318 = pneg %p114
        $region22: #{tpu_custom_call.1} parent=11 // pred_check_branch
          %320 = sbr.rel (%p318) target = $region24
        $region23: #{tpu_custom_call.1} parent=11 // pred_region
          _
        $region24: #{tpu_custom_call.1} parent=11 // pred_fallthru
          _
        // Predicated region
        $region25: #{tpu_custom_call.1} parent=11 // pred_check
          %p321 = pneg %p135
        $region26: #{tpu_custom_call.1} parent=11 // pred_check_branch
          %323 = sbr.rel (%p321) target = $region28
        $region27: #{tpu_custom_call.1} parent=11 // pred_region
          _
        $region28: #{tpu_custom_call.1} parent=11 // pred_fallthru
          _
        // Predicated region
        $region29: #{tpu_custom_call.1} parent=11 // pred_check
          %p324 = pneg %p156
        $region30: #{tpu_custom_call.1} parent=11 // pred_check_branch
          %326 = sbr.rel (%p324) target = $region32
        $region31: #{tpu_custom_call.1} parent=11 // pred_region
          %s328 = ssub.s32 256, 256
          %329 = vsyncadd [#allocation8], %s328
          %s330 = sshll.u32 [#allocation9], 4
          %s331 = int_to_ptr.vmem [resolvable:$true] %s330
          %336 = dma.hbm_to_vmem [thread:$0]  %s5, 256, %s331, [#allocation8], 64, 64, 4
        $region32: #{tpu_custom_call.1} parent=11 // pred_fallthru
          _
        // Predicated region
        $region33: #{tpu_custom_call.1} parent=11 // pred_check
          %p337 = pneg %p177
        $region34: #{tpu_custom_call.1} parent=11 // pred_check_branch
          %339 = sbr.rel (%p337) target = $region36
        $region35: #{tpu_custom_call.1} parent=11 // pred_region
          _
        $region36: #{tpu_custom_call.1} parent=11 // pred_fallthru
          _
        // Predicated region
        $region37: #{tpu_custom_call.1} parent=11 // pred_check
          %p340 = pneg %p198
        $region38: #{tpu_custom_call.1} parent=11 // pred_check_branch
          %342 = sbr.rel (%p340) target = $region40
        $region39: #{tpu_custom_call.1} parent=11 // pred_region
          %s344 = ssub.s32 256, 256
          %345 = vsyncadd [#allocation11], %s344
          %s346 = sshll.u32 [#allocation10], 4
          %s347 = int_to_ptr.vmem [resolvable:$true] %s346
          %352 = dma.hbm_to_vmem [thread:$0]  %s7, 256, %s347, [#allocation11], 64, 64, 4
        $region40: #{tpu_custom_call.1} parent=11 // pred_fallthru
          _
        // Predicated region
        $region41: #{tpu_custom_call.1} parent=11 // pred_check
          %p353 = pneg %p219
        $region42: #{tpu_custom_call.1} parent=11 // pred_check_branch
          %355 = sbr.rel (%p353) target = $region44
        $region43: #{tpu_custom_call.1} parent=11 // pred_region
          _
        $region44: #{tpu_custom_call.1} parent=11 // pred_fallthru
          _
        // Predicated region
        $region45: #{tpu_custom_call.1} parent=11 // pred_check
          %p356 = pneg %p240
        $region46: #{tpu_custom_call.1} parent=11 // pred_check_branch
          %358 = sbr.rel (%p356) target = $region48
        $region47: #{tpu_custom_call.1} parent=11 // pred_region
          _
        $region48: #{tpu_custom_call.1} parent=11 // pred_fallthru
          _
        // Predicated region
        $region49: #{tpu_custom_call.1} parent=11 // pred_check
          %p359 = pneg %p261
        $region50: #{tpu_custom_call.1} parent=11 // pred_check_branch
          %361 = sbr.rel (%p359) target = $region52
        $region51: #{tpu_custom_call.1} parent=11 // pred_region
          _
        $region52: #{tpu_custom_call.1} parent=11 // pred_fallthru
          _
      $region12: #{tpu_custom_call.1} parent=5 // pred_fallthru
        _
      %p362 = scmp.lt.s32.totalorder %s25, 2
      // Predicated region
      $region53: #{tpu_custom_call.1} parent=5 // pred_check
        %p363 = pneg %p362
      $region54: #{tpu_custom_call.1} parent=5 // pred_check_branch
        %365 = sbr.rel (%p363) target = $region56
      $region55: #{tpu_custom_call.1} parent=5 // pred_region
        // Predicated region
        $region57: #{tpu_custom_call.1} parent=55 // pred_check
          %p366 = pneg %p45
        $region58: #{tpu_custom_call.1} parent=55 // pred_check_branch
          %368 = sbr.rel (%p366) target = $region60
        $region59: #{tpu_custom_call.1} parent=55 // pred_region
          %s369 = sand.u32 %s35, 1
          %s370 = scalar_lea.sflag [#allocation5], %s369
          %s371 = sand.u32 %s35, 1
          %s372 = smul.addr %s371, 4
          %s373 = scalar_lea.vmem [#allocation4], %s372
          %s375 = ssub.s32 64, 64
          %376 = vsyncadd %s370, %s375
          %s377 = smul.addr %s25, 64
          %s378 = scalar_lea.hbm %s0, %s377
          %s380 = sshll.u32 %s373, 4
          %s381 = int_to_ptr.vmem [resolvable:$true] %s380
          %383 = dma.hbm_to_vmem [thread:$0]  %s378, 64, %s381, %s370
        $region60: #{tpu_custom_call.1} parent=55 // pred_fallthru
          _
      $region56: #{tpu_custom_call.1} parent=5 // pred_fallthru
        _
      %p384 = scmp.le.s32.totalorder 1, %s25
      %p385 = scmp.lt.s32.totalorder %s25, 3
      %p386 = pnand %p384, %p385
      %p387 = pneg %p386
      // Predicated region
      $region61: #{tpu_custom_call.1} parent=5 // pred_check
        _
      $region62: #{tpu_custom_call.1} parent=5 // pred_check_branch
        %389 = sbr.rel (%p386) target = $region64
      $region63: #{tpu_custom_call.1} parent=5 // pred_region
        %s390 = ssub.s32 %s25, 1
        %s391 = sand.u32 %s38, 1
        %s392 = scalar_lea.sflag [#allocation5], %s391
        %s393 = sand.u32 %s38, 1
        %s394 = smul.addr %s393, 4
        %s395 = scalar_lea.vmem [#allocation4], %s394
        // Predicated region
        $region65: #{tpu_custom_call.1} parent=63 // pred_check
          %p396 = pneg %p51
        $region66: #{tpu_custom_call.1} parent=63 // pred_check_branch
          %398 = sbr.rel (%p396) target = $region68
        $region67: #{tpu_custom_call.1} parent=63 // pred_region
          %399 = dma.done %s392, 64
        $region68: #{tpu_custom_call.1} parent=63 // pred_fallthru
          _
        // Predicated region
        $region69: #{tpu_custom_call.1} parent=63 // pred_check
          %p400 = pneg %p72
        $region70: #{tpu_custom_call.1} parent=63 // pred_check_branch
          %402 = sbr.rel (%p400) target = $region72
        $region71: #{tpu_custom_call.1} parent=63 // pred_region
          %403 = dma.done [#allocation8], 256
        $region72: #{tpu_custom_call.1} parent=63 // pred_fallthru
          _
        // Predicated region
        $region73: #{tpu_custom_call.1} parent=63 // pred_check
          %p404 = pneg %p156
        $region74: #{tpu_custom_call.1} parent=63 // pred_check_branch
          %406 = sbr.rel (%p404) target = $region76
        $region75: #{tpu_custom_call.1} parent=63 // pred_region
          %407 = dma.done [#allocation8], 256
        $region76: #{tpu_custom_call.1} parent=63 // pred_fallthru
          _
        // Predicated region
        $region77: #{tpu_custom_call.1} parent=63 // pred_check
          %p408 = pneg %p198
        $region78: #{tpu_custom_call.1} parent=63 // pred_check_branch
          %410 = sbr.rel (%p408) target = $region80
        $region79: #{tpu_custom_call.1} parent=63 // pred_region
          %411 = dma.done [#allocation11], 256
        $region80: #{tpu_custom_call.1} parent=63 // pred_fallthru
          _
        %s412 = sand.u32 %s38, 1
        %s413 = scalar_lea.sflag [#allocation5], %s412
        %s414 = sand.u32 %s38, 1
        %s415 = smul.addr %s414, 4
        %s416 = scalar_lea.vmem [#allocation4], %s415
        %p417 = pneg %p51
        %p418 = pneg %p48
        %p419 = pneg %p72
        %p420 = pneg %p69
        %p421 = pneg %p93
        %p422 = pneg %p90
        %p423 = pneg %p114
        %p424 = pneg %p111
        %p425 = pneg %p135
        %p426 = pneg %p132
        %p427 = pneg %p156
        %p428 = pneg %p153
        %p429 = pneg %p177
        %p430 = pneg %p174
        %p431 = pneg %p198
        %p432 = pneg %p195
        %p433 = pneg %p219
        %p434 = pneg %p216
        %p435 = pneg %p240
        %p436 = pneg %p237
        %p437 = pneg %p261
        %p438 = pneg %p258
        %p439 = pneg %p287
        %p440 = pneg %p284
        %s441 = sand.u32 %s274, 1
        %s442 = scalar_lea.sflag [#allocation6], %s441
        %s443 = sand.u32 %s274, 1
        %s444 = smul.addr %s443, 4
        %s445 = scalar_lea.vmem [#allocation12], %s444
        %v447 = vld [vmem:[%s395] sm:$0xf]
        %v448 = vld [vmem:[#allocation7] sm:$0xf]
        %v449 = vld [vmem:[#allocation7 + $0x4] sm:$0xf]
        %v450 = vld [vmem:[#allocation7 + $0x8] sm:$0xf]
        %v451 = vld [vmem:[#allocation7 + $0xc] sm:$0xf]
        %v452 = vld [vmem:[%s2] sm:$0x1]
        %v454 = vlaneseq
        %v455 = vshrl.u32 %v454, 7
        %v456 = vsub.s32 0, %v455
        %v457 = vrot.slane %v452, %v456
        %v463 = vunpack.c.l.b16 %v448
        %v464 = vunpack.c.l.b16 %v449
        %v465 = vunpack.c.l.b16 %v450
        %v466 = vunpack.c.l.b16 %v451
        %v467 = vpack.c.b16 %v464, %v463
        %v468 = vpack.c.b16 %v466, %v465
        %vm471 = vcmask 261120
        %v473 = vsel %vm471, %v447, 0
        %475 = vmatprep.subr.bf16.mxu0 0
        %476 = vmatpush1.bf16.msra.mxu0 0
        %477 = vmatprep.subr.bf16.mxu0 0
        %478 = vmatpush1.bf16.msra.mxu0 0
        %479 = vmatprep.subr.bf16.mxu0 0
        %480 = vmatpush1.bf16.msra.mxu0 0
        %481 = vmatprep.subr.bf16.mxu0 0
        %482 = vmatpush1.bf16.msra.mxu0 0
        %483 = vmatprep.subr.bf16.mxu0 0
        %484 = vmatpush1.bf16.msra.mxu0 0
        %485 = vmatprep.subr.bf16.mxu0 0
        %486 = vmatpush1.bf16.msra.mxu0 0
        %487 = vmatprep.subr.bf16.mxu0 0
        %488 = vmatpush1.bf16.msra.mxu0 %v468
        %489 = vmatprep.subr.bf16.mxu0 0
        %490 = vmatpush1.bf16.msra.mxu0 %v467
        %491 = vmatprep.subr.bf16.mxu0 0
        %492 = vmatpush2.bf16.msra.mxu0 0
        %493 = vmatprep.subr.bf16.mxu0 0
        %494 = vmatpush2.bf16.msra.mxu0 0
        %495 = vmatprep.subr.bf16.mxu0 0
        %496 = vmatpush2.bf16.msra.mxu0 0
        %497 = vmatprep.subr.bf16.mxu0 0
        %498 = vmatpush2.bf16.msra.mxu0 0
        %499 = vmatprep.subr.bf16.mxu0 0
        %500 = vmatpush2.bf16.msra.mxu0 0
        %501 = vmatprep.subr.bf16.mxu0 0
        %502 = vmatpush2.bf16.msra.mxu0 0
        %503 = vmatprep.subr.bf16.mxu0 0
        %504 = vmatpush2.bf16.msra.mxu0 0
        %505 = vmatprep.subr.bf16.mxu0 0
        %506 = vmatpush2.bf16.msra.mxu0 0
        %507 = vmatprep.mubr.bf16.mxu0 0
        %508 = vmatmul.mubr.bf16.gmra.mxu0 %v473
        %v509 = vpop.f32.mrf.mxu0
        %v510 = vadd.f32 %v457, %v509
        %v511 = vpop.f32.mrf.mxu0
        %v512 = vpop.f32.mrf.mxu0
        %v513 = vpop.f32.mrf.mxu0
        %514 = vdwg.mxu0
        %v515 = vld [vmem:[%s3] sm:$0x1]
        %v516 = vld [vmem:[%s4] sm:$0x1]
        %v517 = vsel %vm471, %v510, 0.0
        %518 = vadd.xlane.f32.xlu0 %v517
        %v519 = vpop.xlane.xlu0 %518
        %v520 = vrcp.pop 32.0
        %v521 = vmul.f32 %v519, %v520
        %v522 = vsub.f32 %v510, %v521
        %v523 = vmul.f32 %v522, %v522
        %v524 = vsel %vm471, %v523, 0.0
        %525 = vadd.xlane.f32.xlu0 %v524
        %v526 = vpop.xlane.xlu0 %525
        %v527 = vmul.f32 %v526, %v520
        %v528 = vadd.f32 %v527, 1e-05
        %v529 = vrsqrt.pop %v528
        %v530 = vmul.f32 %v522, %v529
        %v532 = vlaneseq
        %v533 = vshrl.u32 %v532, 7
        %v534 = vsub.s32 0, %v533
        %v535 = vrot.slane %v515, %v534
        %v537 = vmul.f32 %v530, %v535
        %v539 = vlaneseq
        %v540 = vshrl.u32 %v539, 7
        %v541 = vsub.s32 0, %v540
        %v542 = vrot.slane %v516, %v541
        %v544 = vadd.f32 %v537, %v542
        %v545 = vpack.c.bf16 %v544, %v544
        %v546 = vld [vmem:[#allocation9] sm:$0xf]
        %v547 = vld [vmem:[#allocation9 + $0x4] sm:$0xf]
        %v548 = vld [vmem:[#allocation9 + $0x8] sm:$0xf]
        %v549 = vld [vmem:[#allocation9 + $0xc] sm:$0xf]
        %v550 = vld [vmem:[%s6] sm:$0x1]
        %v552 = vlaneseq
        %v553 = vshrl.u32 %v552, 7
        %v554 = vsub.s32 0, %v553
        %v555 = vrot.slane %v550, %v554
        %v561 = vunpack.c.l.b16 %v546
        %v562 = vunpack.c.l.b16 %v547
        %v563 = vunpack.c.l.b16 %v548
        %v564 = vunpack.c.l.b16 %v549
        %v565 = vpack.c.b16 %v562, %v561
        %v566 = vpack.c.b16 %v564, %v563
        %v570 = vsel %vm471, %v545, 0
        %572 = vmatprep.subr.bf16.mxu0 0
        %573 = vmatpush1.bf16.msra.mxu0 0
        %574 = vmatprep.subr.bf16.mxu0 0
        %575 = vmatpush1.bf16.msra.mxu0 0
        %576 = vmatprep.subr.bf16.mxu0 0
        %577 = vmatpush1.bf16.msra.mxu0 0
        %578 = vmatprep.subr.bf16.mxu0 0
        %579 = vmatpush1.bf16.msra.mxu0 0
        %580 = vmatprep.subr.bf16.mxu0 0
        %581 = vmatpush1.bf16.msra.mxu0 0
        %582 = vmatprep.subr.bf16.mxu0 0
        %583 = vmatpush1.bf16.msra.mxu0 0
        %584 = vmatprep.subr.bf16.mxu0 0
        %585 = vmatpush1.bf16.msra.mxu0 %v566
        %586 = vmatprep.subr.bf16.mxu0 0
        %587 = vmatpush1.bf16.msra.mxu0 %v565
        %588 = vmatprep.subr.bf16.mxu0 0
        %589 = vmatpush2.bf16.msra.mxu0 0
        %590 = vmatprep.subr.bf16.mxu0 0
        %591 = vmatpush2.bf16.msra.mxu0 0
        %592 = vmatprep.subr.bf16.mxu0 0
        %593 = vmatpush2.bf16.msra.mxu0 0
        %594 = vmatprep.subr.bf16.mxu0 0
        %595 = vmatpush2.bf16.msra.mxu0 0
        %596 = vmatprep.subr.bf16.mxu0 0
        %597 = vmatpush2.bf16.msra.mxu0 0
        %598 = vmatprep.subr.bf16.mxu0 0
        %599 = vmatpush2.bf16.msra.mxu0 0
        %600 = vmatprep.subr.bf16.mxu0 0
        %601 = vmatpush2.bf16.msra.mxu0 0
        %602 = vmatprep.subr.bf16.mxu0 0
        %603 = vmatpush2.bf16.msra.mxu0 0
        %604 = vmatprep.mubr.bf16.mxu0 0
        %605 = vmatmul.mubr.bf16.gmra.mxu0 %v570
        %v606 = vpop.f32.mrf.mxu0
        %v607 = vadd.f32 %v555, %v606
        %v608 = vpop.f32.mrf.mxu0
        %v609 = vpop.f32.mrf.mxu0
        %v610 = vpop.f32.mrf.mxu0
        %611 = vdwg.mxu0
        %v612 = vpack.c.bf16 %v607, %v607
        %vm613 = vcmask 781312
        %614 = vst.msk [vmem:[#allocation2] sm:$0xf] %vm613, %v612
        %v615 = vld [vmem:[#allocation2] sm:$0xf]
        %v617 = vunpack.c.l.b16 %v615
        %v618 = vpack.c.b16 %v617, %v617
        %619 = vrot.lane.b32.xlu0 %v618, 96
        %v620 = vpop.permute.xlu0 %619
        %vm621 = vcmask 31744
        %v623 = vsel %vm621, %v615, 0
        %v626 = vsel %vm621, %v620, 0
        %628 = vmatprep.subr.bf16.mxu0 0
        %629 = vmatpush1.bf16.xpose.msra.mxu0 0
        %630 = vmatprep.subr.bf16.mxu0 0
        %631 = vmatpush1.bf16.xpose.msra.mxu0 0
        %632 = vmatprep.subr.bf16.mxu0 0
        %633 = vmatpush1.bf16.xpose.msra.mxu0 0
        %634 = vmatprep.subr.bf16.mxu0 0
        %635 = vmatpush1.bf16.xpose.msra.mxu0 0
        %636 = vmatprep.subr.bf16.mxu0 0
        %637 = vmatpush1.bf16.xpose.msra.mxu0 0
        %638 = vmatprep.subr.bf16.mxu0 0
        %639 = vmatpush1.bf16.xpose.msra.mxu0 0
        %640 = vmatprep.subr.bf16.mxu0 0
        %641 = vmatpush1.bf16.xpose.msra.mxu0 0
        %642 = vmatprep.subr.bf16.mxu0 0
        %643 = vmatpush1.bf16.xpose.msra.mxu0 %v626
        %644 = vmatprep.subr.bf16.mxu0 0
        %645 = vmatpush2.bf16.xpose.msra.mxu0 0
        %646 = vmatprep.subr.bf16.mxu0 0
        %647 = vmatpush2.bf16.xpose.msra.mxu0 0
        %648 = vmatprep.subr.bf16.mxu0 0
        %649 = vmatpush2.bf16.xpose.msra.mxu0 0
        %650 = vmatprep.subr.bf16.mxu0 0
        %651 = vmatpush2.bf16.xpose.msra.mxu0 0
        %652 = vmatprep.subr.bf16.mxu0 0
        %653 = vmatpush2.bf16.xpose.msra.mxu0 0
        %654 = vmatprep.subr.bf16.mxu0 0
        %655 = vmatpush2.bf16.xpose.msra.mxu0 0
        %656 = vmatprep.subr.bf16.mxu0 0
        %657 = vmatpush2.bf16.xpose.msra.mxu0 0
        %658 = vmatprep.subr.bf16.mxu0 0
        %659 = vmatpush2.bf16.xpose.msra.mxu0 0
        %660 = vmatprep.mubr.bf16.mxu0 0
        %661 = vmatmul.mubr.bf16.gmra.mxu0 %v623
        %v662 = vpop.f32.mrf.mxu0
        %v663 = vadd.f32 0.0, %v662
        %v664 = vpop.f32.mrf.mxu0
        %v665 = vpop.f32.mrf.mxu0
        %v666 = vpop.f32.mrf.mxu0
        %667 = vdwg.mxu0
        %v668 = vmul.f32 %v663, 0.5
        %vm669 = vcmask 64512
        %v670 = vsel %vm669, %v668, -inf
        %671 = vmax.xlane.f32.xlu0 %v670
        %v672 = vpop.xlane.xlu0 %671
        %v673 = vsub.f32 %v668, %v672
        %v674 = vmul.f32 %v673, 1.442695
        %v675 = vpow.pop %v674
        %v676 = vsel %vm669, %v675, 0.0
        %677 = vadd.xlane.f32.xlu0 %v676
        %v678 = vpop.xlane.xlu0 %677
        %v679 = vrcp.pop %v678
        %v680 = vmul.f32 %v675, %v679
        %v681 = vpack.c.bf16 %v680, %v680
        %682 = vrot.lane.b32.xlu0 %v618, 64
        %v683 = vpop.permute.xlu0 %682
        %v685 = vsel %vm669, %v681, 0
        %vm687 = vcmask 1043456
        %v689 = vsel %vm687, %v683, 0
        %691 = vmatprep.subr.bf16.mxu0 0
        %692 = vmatpush1.bf16.msra.mxu0 0
        %693 = vmatprep.subr.bf16.mxu0 0
        %694 = vmatpush1.bf16.msra.mxu0 0
        %695 = vmatprep.subr.bf16.mxu0 0
        %696 = vmatpush1.bf16.msra.mxu0 0
        %697 = vmatprep.subr.bf16.mxu0 0
        %698 = vmatpush1.bf16.msra.mxu0 0
        %699 = vmatprep.subr.bf16.mxu0 0
        %700 = vmatpush1.bf16.msra.mxu0 0
        %701 = vmatprep.subr.bf16.mxu0 0
        %702 = vmatpush1.bf16.msra.mxu0 0
        %703 = vmatprep.subr.bf16.mxu0 0
        %704 = vmatpush1.bf16.msra.mxu0 0
        %705 = vmatprep.subr.bf16.mxu0 0
        %706 = vmatpush1.bf16.msra.mxu0 %v689
        %707 = vmatprep.subr.bf16.mxu0 0
        %708 = vmatpush2.bf16.msra.mxu0 0
        %709 = vmatprep.subr.bf16.mxu0 0
        %710 = vmatpush2.bf16.msra.mxu0 0
        %711 = vmatprep.subr.bf16.mxu0 0
        %712 = vmatpush2.bf16.msra.mxu0 0
        %713 = vmatprep.subr.bf16.mxu0 0
        %714 = vmatpush2.bf16.msra.mxu0 0
        %715 = vmatprep.subr.bf16.mxu0 0
        %716 = vmatpush2.bf16.msra.mxu0 0
        %717 = vmatprep.subr.bf16.mxu0 0
        %718 = vmatpush2.bf16.msra.mxu0 0
        %719 = vmatprep.subr.bf16.mxu0 0
        %720 = vmatpush2.bf16.msra.mxu0 0
        %721 = vmatprep.subr.bf16.mxu0 0
        %722 = vmatpush2.bf16.msra.mxu0 0
        %723 = vmatprep.mubr.bf16.mxu0 0
        %724 = vmatmul.mubr.bf16.gmra.mxu0 %v685
        %v725 = vpop.f32.mrf.mxu0
        %v726 = vadd.f32 0.0, %v725
        %v727 = vpop.f32.mrf.mxu0
        %v728 = vpop.f32.mrf.mxu0
        %v729 = vpop.f32.mrf.mxu0
        %730 = vdwg.mxu0
        %v731 = vpack.c.bf16 %v726, %v726
        %vm732 = vcmask 27648
        %733 = vst.msk [vmem:[#allocation3] sm:$0xf] %vm732, %v731
        %v734 = vld [vmem:[#allocation2] sm:$0xf]
        %v736 = vunpack.c.l.b16 %v734
        %v737 = vpack.c.b16 %v736, %v736
        %738 = vrot.lane.b32.xlu0 %v737, 124
        %v739 = vpop.permute.xlu0 %738
        %740 = vrot.lane.b32.xlu0 %v737, 92
        %v741 = vpop.permute.xlu0 %740
        %v743 = vsel %vm621, %v739, 0
        %v746 = vsel %vm621, %v741, 0
        %748 = vmatprep.subr.bf16.mxu0 0
        %749 = vmatpush1.bf16.xpose.msra.mxu0 0
        %750 = vmatprep.subr.bf16.mxu0 0
        %751 = vmatpush1.bf16.xpose.msra.mxu0 0
        %752 = vmatprep.subr.bf16.mxu0 0
        %753 = vmatpush1.bf16.xpose.msra.mxu0 0
        %754 = vmatprep.subr.bf16.mxu0 0
        %755 = vmatpush1.bf16.xpose.msra.mxu0 0
        %756 = vmatprep.subr.bf16.mxu0 0
        %757 = vmatpush1.bf16.xpose.msra.mxu0 0
        %758 = vmatprep.subr.bf16.mxu0 0
        %759 = vmatpush1.bf16.xpose.msra.mxu0 0
        %760 = vmatprep.subr.bf16.mxu0 0
        %761 = vmatpush1.bf16.xpose.msra.mxu0 0
        %762 = vmatprep.subr.bf16.mxu0 0
        %763 = vmatpush1.bf16.xpose.msra.mxu0 %v746
        %764 = vmatprep.subr.bf16.mxu0 0
        %765 = vmatpush2.bf16.xpose.msra.mxu0 0
        %766 = vmatprep.subr.bf16.mxu0 0
        %767 = vmatpush2.bf16.xpose.msra.mxu0 0
        %768 = vmatprep.subr.bf16.mxu0 0
        %769 = vmatpush2.bf16.xpose.msra.mxu0 0
        %770 = vmatprep.subr.bf16.mxu0 0
        %771 = vmatpush2.bf16.xpose.msra.mxu0 0
        %772 = vmatprep.subr.bf16.mxu0 0
        %773 = vmatpush2.bf16.xpose.msra.mxu0 0
        %774 = vmatprep.subr.bf16.mxu0 0
        %775 = vmatpush2.bf16.xpose.msra.mxu0 0
        %776 = vmatprep.subr.bf16.mxu0 0
        %777 = vmatpush2.bf16.xpose.msra.mxu0 0
        %778 = vmatprep.subr.bf16.mxu0 0
        %779 = vmatpush2.bf16.xpose.msra.mxu0 0
        %780 = vmatprep.mubr.bf16.mxu0 0
        %781 = vmatmul.mubr.bf16.gmra.mxu0 %v743
        %v782 = vpop.f32.mrf.mxu0
        %v783 = vadd.f32 0.0, %v782
        %v784 = vpop.f32.mrf.mxu0
        %v785 = vpop.f32.mrf.mxu0
        %v786 = vpop.f32.mrf.mxu0
        %787 = vdwg.mxu0
        %v788 = vmul.f32 %v783, 0.5
        %v789 = vsel %vm669, %v788, -inf
        %790 = vmax.xlane.f32.xlu0 %v789
        %v791 = vpop.xlane.xlu0 %790
        %v792 = vsub.f32 %v788, %v791
        %v793 = vmul.f32 %v792, 1.442695
        %v794 = vpow.pop %v793
        %v795 = vsel %vm669, %v794, 0.0
        %796 = vadd.xlane.f32.xlu0 %v795
        %v797 = vpop.xlane.xlu0 %796
        %v798 = vrcp.pop %v797
        %v799 = vmul.f32 %v794, %v798
        %v800 = vpack.c.bf16 %v799, %v799
        %801 = vrot.lane.b32.xlu0 %v737, 60
        %v802 = vpop.permute.xlu0 %801
        %v804 = vsel %vm669, %v800, 0
        %v807 = vsel %vm687, %v802, 0
        %809 = vmatprep.subr.bf16.mxu0 0
        %810 = vmatpush1.bf16.msra.mxu0 0
        %811 = vmatprep.subr.bf16.mxu0 0
        %812 = vmatpush1.bf16.msra.mxu0 0
        %813 = vmatprep.subr.bf16.mxu0 0
        %814 = vmatpush1.bf16.msra.mxu0 0
        %815 = vmatprep.subr.bf16.mxu0 0
        %816 = vmatpush1.bf16.msra.mxu0 0
        %817 = vmatprep.subr.bf16.mxu0 0
        %818 = vmatpush1.bf16.msra.mxu0 0
        %819 = vmatprep.subr.bf16.mxu0 0
        %820 = vmatpush1.bf16.msra.mxu0 0
        %821 = vmatprep.subr.bf16.mxu0 0
        %822 = vmatpush1.bf16.msra.mxu0 0
        %823 = vmatprep.subr.bf16.mxu0 0
        %824 = vmatpush1.bf16.msra.mxu0 %v807
        %825 = vmatprep.subr.bf16.mxu0 0
        %826 = vmatpush2.bf16.msra.mxu0 0
        %827 = vmatprep.subr.bf16.mxu0 0
        %828 = vmatpush2.bf16.msra.mxu0 0
        %829 = vmatprep.subr.bf16.mxu0 0
        %830 = vmatpush2.bf16.msra.mxu0 0
        %831 = vmatprep.subr.bf16.mxu0 0
        %832 = vmatpush2.bf16.msra.mxu0 0
        %833 = vmatprep.subr.bf16.mxu0 0
        %834 = vmatpush2.bf16.msra.mxu0 0
        %835 = vmatprep.subr.bf16.mxu0 0
        %836 = vmatpush2.bf16.msra.mxu0 0
        %837 = vmatprep.subr.bf16.mxu0 0
        %838 = vmatpush2.bf16.msra.mxu0 0
        %839 = vmatprep.subr.bf16.mxu0 0
        %840 = vmatpush2.bf16.msra.mxu0 0
        %841 = vmatprep.mubr.bf16.mxu0 0
        %842 = vmatmul.mubr.bf16.gmra.mxu0 %v804
        %v843 = vpop.f32.mrf.mxu0
        %v844 = vadd.f32 0.0, %v843
        %v845 = vpop.f32.mrf.mxu0
        %v846 = vpop.f32.mrf.mxu0
        %v847 = vpop.f32.mrf.mxu0
        %848 = vdwg.mxu0
        %v849 = vpack.c.bf16 %v844, %v844
        %v851 = vunpack.c.l.b16 %v849
        %v852 = vpack.c.b16 %v851, %v851
        %853 = vrot.lane.b32.xlu0 %v852, 4
        %v854 = vpop.permute.xlu0 %853
        %vm856 = vcmask 60448
        %857 = vst.msk [vmem:[#allocation3] sm:$0xf] %vm856, %v854
        %v858 = vld [vmem:[#allocation2] sm:$0xf]
        %v860 = vunpack.c.l.b16 %v858
        %v861 = vpack.c.b16 %v860, %v860
        %862 = vrot.lane.b32.xlu0 %v861, 120
        %v863 = vpop.permute.xlu0 %862
        %864 = vrot.lane.b32.xlu0 %v861, 88
        %v865 = vpop.permute.xlu0 %864
        %v867 = vsel %vm621, %v863, 0
        %v870 = vsel %vm621, %v865, 0
        %872 = vmatprep.subr.bf16.mxu0 0
        %873 = vmatpush1.bf16.xpose.msra.mxu0 0
        %874 = vmatprep.subr.bf16.mxu0 0
        %875 = vmatpush1.bf16.xpose.msra.mxu0 0
        %876 = vmatprep.subr.bf16.mxu0 0
        %877 = vmatpush1.bf16.xpose.msra.mxu0 0
        %878 = vmatprep.subr.bf16.mxu0 0
        %879 = vmatpush1.bf16.xpose.msra.mxu0 0
        %880 = vmatprep.subr.bf16.mxu0 0
        %881 = vmatpush1.bf16.xpose.msra.mxu0 0
        %882 = vmatprep.subr.bf16.mxu0 0
        %883 = vmatpush1.bf16.xpose.msra.mxu0 0
        %884 = vmatprep.subr.bf16.mxu0 0
        %885 = vmatpush1.bf16.xpose.msra.mxu0 0
        %886 = vmatprep.subr.bf16.mxu0 0
        %887 = vmatpush1.bf16.xpose.msra.mxu0 %v870
        %888 = vmatprep.subr.bf16.mxu0 0
        %889 = vmatpush2.bf16.xpose.msra.mxu0 0
        %890 = vmatprep.subr.bf16.mxu0 0
        %891 = vmatpush2.bf16.xpose.msra.mxu0 0
        %892 = vmatprep.subr.bf16.mxu0 0
        %893 = vmatpush2.bf16.xpose.msra.mxu0 0
        %894 = vmatprep.subr.bf16.mxu0 0
        %895 = vmatpush2.bf16.xpose.msra.mxu0 0
        %896 = vmatprep.subr.bf16.mxu0 0
        %897 = vmatpush2.bf16.xpose.msra.mxu0 0
        %898 = vmatprep.subr.bf16.mxu0 0
        %899 = vmatpush2.bf16.xpose.msra.mxu0 0
        %900 = vmatprep.subr.bf16.mxu0 0
        %901 = vmatpush2.bf16.xpose.msra.mxu0 0
        %902 = vmatprep.subr.bf16.mxu0 0
        %903 = vmatpush2.bf16.xpose.msra.mxu0 0
        %904 = vmatprep.mubr.bf16.mxu0 0
        %905 = vmatmul.mubr.bf16.gmra.mxu0 %v867
        %v906 = vpop.f32.mrf.mxu0
        %v907 = vadd.f32 0.0, %v906
        %v908 = vpop.f32.mrf.mxu0
        %v909 = vpop.f32.mrf.mxu0
        %v910 = vpop.f32.mrf.mxu0
        %911 = vdwg.mxu0
        %v912 = vmul.f32 %v907, 0.5
        %v913 = vsel %vm669, %v912, -inf
        %914 = vmax.xlane.f32.xlu0 %v913
        %v915 = vpop.xlane.xlu0 %914
        %v916 = vsub.f32 %v912, %v915
        %v917 = vmul.f32 %v916, 1.442695
        %v918 = vpow.pop %v917
        %v919 = vsel %vm669, %v918, 0.0
        %920 = vadd.xlane.f32.xlu0 %v919
        %v921 = vpop.xlane.xlu0 %920
        %v922 = vrcp.pop %v921
        %v923 = vmul.f32 %v918, %v922
        %v924 = vpack.c.bf16 %v923, %v923
        %925 = vrot.lane.b32.xlu0 %v861, 56
        %v926 = vpop.permute.xlu0 %925
        %v928 = vsel %vm669, %v924, 0
        %v931 = vsel %vm687, %v926, 0
        %933 = vmatprep.subr.bf16.mxu0 0
        %934 = vmatpush1.bf16.msra.mxu0 0
        %935 = vmatprep.subr.bf16.mxu0 0
        %936 = vmatpush1.bf16.msra.mxu0 0
        %937 = vmatprep.subr.bf16.mxu0 0
        %938 = vmatpush1.bf16.msra.mxu0 0
        %939 = vmatprep.subr.bf16.mxu0 0
        %940 = vmatpush1.bf16.msra.mxu0 0
        %941 = vmatprep.subr.bf16.mxu0 0
        %942 = vmatpush1.bf16.msra.mxu0 0
        %943 = vmatprep.subr.bf16.mxu0 0
        %944 = vmatpush1.bf16.msra.mxu0 0
        %945 = vmatprep.subr.bf16.mxu0 0
        %946 = vmatpush1.bf16.msra.mxu0 0
        %947 = vmatprep.subr.bf16.mxu0 0
        %948 = vmatpush1.bf16.msra.mxu0 %v931
        %949 = vmatprep.subr.bf16.mxu0 0
        %950 = vmatpush2.bf16.msra.mxu0 0
        %951 = vmatprep.subr.bf16.mxu0 0
        %952 = vmatpush2.bf16.msra.mxu0 0
        %953 = vmatprep.subr.bf16.mxu0 0
        %954 = vmatpush2.bf16.msra.mxu0 0
        %955 = vmatprep.subr.bf16.mxu0 0
        %956 = vmatpush2.bf16.msra.mxu0 0
        %957 = vmatprep.subr.bf16.mxu0 0
        %958 = vmatpush2.bf16.msra.mxu0 0
        %959 = vmatprep.subr.bf16.mxu0 0
        %960 = vmatpush2.bf16.msra.mxu0 0
        %961 = vmatprep.subr.bf16.mxu0 0
        %962 = vmatpush2.bf16.msra.mxu0 0
        %963 = vmatprep.subr.bf16.mxu0 0
        %964 = vmatpush2.bf16.msra.mxu0 0
        %965 = vmatprep.mubr.bf16.mxu0 0
        %966 = vmatmul.mubr.bf16.gmra.mxu0 %v928
        %v967 = vpop.f32.mrf.mxu0
        %v968 = vadd.f32 0.0, %v967
        %v969 = vpop.f32.mrf.mxu0
        %v970 = vpop.f32.mrf.mxu0
        %v971 = vpop.f32.mrf.mxu0
        %972 = vdwg.mxu0
        %v973 = vpack.c.bf16 %v968, %v968
        %v975 = vunpack.c.l.b16 %v973
        %v976 = vpack.c.b16 %v975, %v975
        %977 = vrot.lane.b32.xlu0 %v976, 8
        %v978 = vpop.permute.xlu0 %977
        %vm980 = vcmask 93248
        %981 = vst.msk [vmem:[#allocation3] sm:$0xf] %vm980, %v978
        %v982 = vld [vmem:[#allocation2] sm:$0xf]
        %v984 = vunpack.c.l.b16 %v982
        %v985 = vpack.c.b16 %v984, %v984
        %986 = vrot.lane.b32.xlu0 %v985, 116
        %v987 = vpop.permute.xlu0 %986
        %988 = vrot.lane.b32.xlu0 %v985, 84
        %v989 = vpop.permute.xlu0 %988
        %v991 = vsel %vm621, %v987, 0
        %v994 = vsel %vm621, %v989, 0
        %996 = vmatprep.subr.bf16.mxu0 0
        %997 = vmatpush1.bf16.xpose.msra.mxu0 0
        %998 = vmatprep.subr.bf16.mxu0 0
        %999 = vmatpush1.bf16.xpose.msra.mxu0 0
        %1000 = vmatprep.subr.bf16.mxu0 0
        %1001 = vmatpush1.bf16.xpose.msra.mxu0 0
        %1002 = vmatprep.subr.bf16.mxu0 0
        %1003 = vmatpush1.bf16.xpose.msra.mxu0 0
        %1004 = vmatprep.subr.bf16.mxu0 0
        %1005 = vmatpush1.bf16.xpose.msra.mxu0 0
        %1006 = vmatprep.subr.bf16.mxu0 0
        %1007 = vmatpush1.bf16.xpose.msra.mxu0 0
        %1008 = vmatprep.subr.bf16.mxu0 0
        %1009 = vmatpush1.bf16.xpose.msra.mxu0 0
        %1010 = vmatprep.subr.bf16.mxu0 0
        %1011 = vmatpush1.bf16.xpose.msra.mxu0 %v994
        %1012 = vmatprep.subr.bf16.mxu0 0
        %1013 = vmatpush2.bf16.xpose.msra.mxu0 0
        %1014 = vmatprep.subr.bf16.mxu0 0
        %1015 = vmatpush2.bf16.xpose.msra.mxu0 0
        %1016 = vmatprep.subr.bf16.mxu0 0
        %1017 = vmatpush2.bf16.xpose.msra.mxu0 0
        %1018 = vmatprep.subr.bf16.mxu0 0
        %1019 = vmatpush2.bf16.xpose.msra.mxu0 0
        %1020 = vmatprep.subr.bf16.mxu0 0
        %1021 = vmatpush2.bf16.xpose.msra.mxu0 0
        %1022 = vmatprep.subr.bf16.mxu0 0
        %1023 = vmatpush2.bf16.xpose.msra.mxu0 0
        %1024 = vmatprep.subr.bf16.mxu0 0
        %1025 = vmatpush2.bf16.xpose.msra.mxu0 0
        %1026 = vmatprep.subr.bf16.mxu0 0
        %1027 = vmatpush2.bf16.xpose.msra.mxu0 0
        %1028 = vmatprep.mubr.bf16.mxu0 0
        %1029 = vmatmul.mubr.bf16.gmra.mxu0 %v991
        %v1030 = vpop.f32.mrf.mxu0
        %v1031 = vadd.f32 0.0, %v1030
        %v1032 = vpop.f32.mrf.mxu0
        %v1033 = vpop.f32.mrf.mxu0
        %v1034 = vpop.f32.mrf.mxu0
        %1035 = vdwg.mxu0
        %v1036 = vmul.f32 %v1031, 0.5
        %v1037 = vsel %vm669, %v1036, -inf
        %1038 = vmax.xlane.f32.xlu0 %v1037
        %v1039 = vpop.xlane.xlu0 %1038
        %v1040 = vsub.f32 %v1036, %v1039
        %v1041 = vmul.f32 %v1040, 1.442695
        %v1042 = vpow.pop %v1041
        %v1043 = vsel %vm669, %v1042, 0.0
        %1044 = vadd.xlane.f32.xlu0 %v1043
        %v1045 = vpop.xlane.xlu0 %1044
        %v1046 = vrcp.pop %v1045
        %v1047 = vmul.f32 %v1042, %v1046
        %v1048 = vpack.c.bf16 %v1047, %v1047
        %1049 = vrot.lane.b32.xlu0 %v985, 52
        %v1050 = vpop.permute.xlu0 %1049
        %v1052 = vsel %vm669, %v1048, 0
        %v1055 = vsel %vm687, %v1050, 0
        %1057 = vmatprep.subr.bf16.mxu0 0
        %1058 = vmatpush1.bf16.msra.mxu0 0
        %1059 = vmatprep.subr.bf16.mxu0 0
        %1060 = vmatpush1.bf16.msra.mxu0 0
        %1061 = vmatprep.subr.bf16.mxu0 0
        %1062 = vmatpush1.bf16.msra.mxu0 0
        %1063 = vmatprep.subr.bf16.mxu0 0
        %1064 = vmatpush1.bf16.msra.mxu0 0
        %1065 = vmatprep.subr.bf16.mxu0 0
        %1066 = vmatpush1.bf16.msra.mxu0 0
        %1067 = vmatprep.subr.bf16.mxu0 0
        %1068 = vmatpush1.bf16.msra.mxu0 0
        %1069 = vmatprep.subr.bf16.mxu0 0
        %1070 = vmatpush1.bf16.msra.mxu0 0
        %1071 = vmatprep.subr.bf16.mxu0 0
        %1072 = vmatpush1.bf16.msra.mxu0 %v1055
        %1073 = vmatprep.subr.bf16.mxu0 0
        %1074 = vmatpush2.bf16.msra.mxu0 0
        %1075 = vmatprep.subr.bf16.mxu0 0
        %1076 = vmatpush2.bf16.msra.mxu0 0
        %1077 = vmatprep.subr.bf16.mxu0 0
        %1078 = vmatpush2.bf16.msra.mxu0 0
        %1079 = vmatprep.subr.bf16.mxu0 0
        %1080 = vmatpush2.bf16.msra.mxu0 0
        %1081 = vmatprep.subr.bf16.mxu0 0
        %1082 = vmatpush2.bf16.msra.mxu0 0
        %1083 = vmatprep.subr.bf16.mxu0 0
        %1084 = vmatpush2.bf16.msra.mxu0 0
        %1085 = vmatprep.subr.bf16.mxu0 0
        %1086 = vmatpush2.bf16.msra.mxu0 0
        %1087 = vmatprep.subr.bf16.mxu0 0
        %1088 = vmatpush2.bf16.msra.mxu0 0
        %1089 = vmatprep.mubr.bf16.mxu0 0
        %1090 = vmatmul.mubr.bf16.gmra.mxu0 %v1052
        %v1091 = vpop.f32.mrf.mxu0
        %v1092 = vadd.f32 0.0, %v1091
        %v1093 = vpop.f32.mrf.mxu0
        %v1094 = vpop.f32.mrf.mxu0
        %v1095 = vpop.f32.mrf.mxu0
        %1096 = vdwg.mxu0
        %v1097 = vpack.c.bf16 %v1092, %v1092
        %v1099 = vunpack.c.l.b16 %v1097
        %v1100 = vpack.c.b16 %v1099, %v1099
        %1101 = vrot.lane.b32.xlu0 %v1100, 12
        %v1102 = vpop.permute.xlu0 %1101
        %vm1104 = vcmask 126048
        %1105 = vst.msk [vmem:[#allocation3] sm:$0xf] %vm1104, %v1102
        %v1106 = vld [vmem:[#allocation2] sm:$0xf]
        %v1108 = vunpack.c.l.b16 %v1106
        %v1109 = vpack.c.b16 %v1108, %v1108
        %1110 = vrot.lane.b32.xlu0 %v1109, 112
        %v1111 = vpop.permute.xlu0 %1110
        %1112 = vrot.lane.b32.xlu0 %v1109, 80
        %v1113 = vpop.permute.xlu0 %1112
        %v1115 = vsel %vm621, %v1111, 0
        %v1118 = vsel %vm621, %v1113, 0
        %1120 = vmatprep.subr.bf16.mxu0 0
        %1121 = vmatpush1.bf16.xpose.msra.mxu0 0
        %1122 = vmatprep.subr.bf16.mxu0 0
        %1123 = vmatpush1.bf16.xpose.msra.mxu0 0
        %1124 = vmatprep.subr.bf16.mxu0 0
        %1125 = vmatpush1.bf16.xpose.msra.mxu0 0
        %1126 = vmatprep.subr.bf16.mxu0 0
        %1127 = vmatpush1.bf16.xpose.msra.mxu0 0
        %1128 = vmatprep.subr.bf16.mxu0 0
        %1129 = vmatpush1.bf16.xpose.msra.mxu0 0
        %1130 = vmatprep.subr.bf16.mxu0 0
        %1131 = vmatpush1.bf16.xpose.msra.mxu0 0
        %1132 = vmatprep.subr.bf16.mxu0 0
        %1133 = vmatpush1.bf16.xpose.msra.mxu0 0
        %1134 = vmatprep.subr.bf16.mxu0 0
        %1135 = vmatpush1.bf16.xpose.msra.mxu0 %v1118
        %1136 = vmatprep.subr.bf16.mxu0 0
        %1137 = vmatpush2.bf16.xpose.msra.mxu0 0
        %1138 = vmatprep.subr.bf16.mxu0 0
        %1139 = vmatpush2.bf16.xpose.msra.mxu0 0
        %1140 = vmatprep.subr.bf16.mxu0 0
        %1141 = vmatpush2.bf16.xpose.msra.mxu0 0
        %1142 = vmatprep.subr.bf16.mxu0 0
        %1143 = vmatpush2.bf16.xpose.msra.mxu0 0
        %1144 = vmatprep.subr.bf16.mxu0 0
        %1145 = vmatpush2.bf16.xpose.msra.mxu0 0
        %1146 = vmatprep.subr.bf16.mxu0 0
        %1147 = vmatpush2.bf16.xpose.msra.mxu0 0
        %1148 = vmatprep.subr.bf16.mxu0 0
        %1149 = vmatpush2.bf16.xpose.msra.mxu0 0
        %1150 = vmatprep.subr.bf16.mxu0 0
        %1151 = vmatpush2.bf16.xpose.msra.mxu0 0
        %1152 = vmatprep.mubr.bf16.mxu0 0
        %1153 = vmatmul.mubr.bf16.gmra.mxu0 %v1115
        %v1154 = vpop.f32.mrf.mxu0
        %v1155 = vadd.f32 0.0, %v1154
        %v1156 = vpop.f32.mrf.mxu0
        %v1157 = vpop.f32.mrf.mxu0
        %v1158 = vpop.f32.mrf.mxu0
        %1159 = vdwg.mxu0
        %v1160 = vmul.f32 %v1155, 0.5
        %v1161 = vsel %vm669, %v1160, -inf
        %1162 = vmax.xlane.f32.xlu0 %v1161
        %v1163 = vpop.xlane.xlu0 %1162
        %v1164 = vsub.f32 %v1160, %v1163
        %v1165 = vmul.f32 %v1164, 1.442695
        %v1166 = vpow.pop %v1165
        %v1167 = vsel %vm669, %v1166, 0.0
        %1168 = vadd.xlane.f32.xlu0 %v1167
        %v1169 = vpop.xlane.xlu0 %1168
        %v1170 = vrcp.pop %v1169
        %v1171 = vmul.f32 %v1166, %v1170
        %v1172 = vpack.c.bf16 %v1171, %v1171
        %1173 = vrot.lane.b32.xlu0 %v1109, 48
        %v1174 = vpop.permute.xlu0 %1173
        %v1176 = vsel %vm669, %v1172, 0
        %v1179 = vsel %vm687, %v1174, 0
        %1181 = vmatprep.subr.bf16.mxu0 0
        %1182 = vmatpush1.bf16.msra.mxu0 0
        %1183 = vmatprep.subr.bf16.mxu0 0
        %1184 = vmatpush1.bf16.msra.mxu0 0
        %1185 = vmatprep.subr.bf16.mxu0 0
        %1186 = vmatpush1.bf16.msra.mxu0 0
        %1187 = vmatprep.subr.bf16.mxu0 0
        %1188 = vmatpush1.bf16.msra.mxu0 0
        %1189 = vmatprep.subr.bf16.mxu0 0
        %1190 = vmatpush1.bf16.msra.mxu0 0
        %1191 = vmatprep.subr.bf16.mxu0 0
        %1192 = vmatpush1.bf16.msra.mxu0 0
        %1193 = vmatprep.subr.bf16.mxu0 0
        %1194 = vmatpush1.bf16.msra.mxu0 0
        %1195 = vmatprep.subr.bf16.mxu0 0
        %1196 = vmatpush1.bf16.msra.mxu0 %v1179
        %1197 = vmatprep.subr.bf16.mxu0 0
        %1198 = vmatpush2.bf16.msra.mxu0 0
        %1199 = vmatprep.subr.bf16.mxu0 0
        %1200 = vmatpush2.bf16.msra.mxu0 0
        %1201 = vmatprep.subr.bf16.mxu0 0
        %1202 = vmatpush2.bf16.msra.mxu0 0
        %1203 = vmatprep.subr.bf16.mxu0 0
        %1204 = vmatpush2.bf16.msra.mxu0 0
        %1205 = vmatprep.subr.bf16.mxu0 0
        %1206 = vmatpush2.bf16.msra.mxu0 0
        %1207 = vmatprep.subr.bf16.mxu0 0
        %1208 = vmatpush2.bf16.msra.mxu0 0
        %1209 = vmatprep.subr.bf16.mxu0 0
        %1210 = vmatpush2.bf16.msra.mxu0 0
        %1211 = vmatprep.subr.bf16.mxu0 0
        %1212 = vmatpush2.bf16.msra.mxu0 0
        %1213 = vmatprep.mubr.bf16.mxu0 0
        %1214 = vmatmul.mubr.bf16.gmra.mxu0 %v1176
        %v1215 = vpop.f32.mrf.mxu0
        %v1216 = vadd.f32 0.0, %v1215
        %v1217 = vpop.f32.mrf.mxu0
        %v1218 = vpop.f32.mrf.mxu0
        %v1219 = vpop.f32.mrf.mxu0
        %1220 = vdwg.mxu0
        %v1221 = vpack.c.bf16 %v1216, %v1216
        %v1223 = vunpack.c.l.b16 %v1221
        %v1224 = vpack.c.b16 %v1223, %v1223
        %1225 = vrot.lane.b32.xlu0 %v1224, 16
        %v1226 = vpop.permute.xlu0 %1225
        %vm1228 = vcmask 158848
        %1229 = vst.msk [vmem:[#allocation3] sm:$0xf] %vm1228, %v1226
        %v1230 = vld [vmem:[#allocation2] sm:$0xf]
        %v1232 = vunpack.c.l.b16 %v1230
        %v1233 = vpack.c.b16 %v1232, %v1232
        %1234 = vrot.lane.b32.xlu0 %v1233, 108
        %v1235 = vpop.permute.xlu0 %1234
        %1236 = vrot.lane.b32.xlu0 %v1233, 76
        %v1237 = vpop.permute.xlu0 %1236
        %v1239 = vsel %vm621, %v1235, 0
        %v1242 = vsel %vm621, %v1237, 0
        %1244 = vmatprep.subr.bf16.mxu0 0
        %1245 = vmatpush1.bf16.xpose.msra.mxu0 0
        %1246 = vmatprep.subr.bf16.mxu0 0
        %1247 = vmatpush1.bf16.xpose.msra.mxu0 0
        %1248 = vmatprep.subr.bf16.mxu0 0
        %1249 = vmatpush1.bf16.xpose.msra.mxu0 0
        %1250 = vmatprep.subr.bf16.mxu0 0
        %1251 = vmatpush1.bf16.xpose.msra.mxu0 0
        %1252 = vmatprep.subr.bf16.mxu0 0
        %1253 = vmatpush1.bf16.xpose.msra.mxu0 0
        %1254 = vmatprep.subr.bf16.mxu0 0
        %1255 = vmatpush1.bf16.xpose.msra.mxu0 0
        %1256 = vmatprep.subr.bf16.mxu0 0
        %1257 = vmatpush1.bf16.xpose.msra.mxu0 0
        %1258 = vmatprep.subr.bf16.mxu0 0
        %1259 = vmatpush1.bf16.xpose.msra.mxu0 %v1242
        %1260 = vmatprep.subr.bf16.mxu0 0
        %1261 = vmatpush2.bf16.xpose.msra.mxu0 0
        %1262 = vmatprep.subr.bf16.mxu0 0
        %1263 = vmatpush2.bf16.xpose.msra.mxu0 0
        %1264 = vmatprep.subr.bf16.mxu0 0
        %1265 = vmatpush2.bf16.xpose.msra.mxu0 0
        %1266 = vmatprep.subr.bf16.mxu0 0
        %1267 = vmatpush2.bf16.xpose.msra.mxu0 0
        %1268 = vmatprep.subr.bf16.mxu0 0
        %1269 = vmatpush2.bf16.xpose.msra.mxu0 0
        %1270 = vmatprep.subr.bf16.mxu0 0
        %1271 = vmatpush2.bf16.xpose.msra.mxu0 0
        %1272 = vmatprep.subr.bf16.mxu0 0
        %1273 = vmatpush2.bf16.xpose.msra.mxu0 0
        %1274 = vmatprep.subr.bf16.mxu0 0
        %1275 = vmatpush2.bf16.xpose.msra.mxu0 0
        %1276 = vmatprep.mubr.bf16.mxu0 0
        %1277 = vmatmul.mubr.bf16.gmra.mxu0 %v1239
        %v1278 = vpop.f32.mrf.mxu0
        %v1279 = vadd.f32 0.0, %v1278
        %v1280 = vpop.f32.mrf.mxu0
        %v1281 = vpop.f32.mrf.mxu0
        %v1282 = vpop.f32.mrf.mxu0
        %1283 = vdwg.mxu0
        %v1284 = vmul.f32 %v1279, 0.5
        %v1285 = vsel %vm669, %v1284, -inf
        %1286 = vmax.xlane.f32.xlu0 %v1285
        %v1287 = vpop.xlane.xlu0 %1286
        %v1288 = vsub.f32 %v1284, %v1287
        %v1289 = vmul.f32 %v1288, 1.442695
        %v1290 = vpow.pop %v1289
        %v1291 = vsel %vm669, %v1290, 0.0
        %1292 = vadd.xlane.f32.xlu0 %v1291
        %v1293 = vpop.xlane.xlu0 %1292
        %v1294 = vrcp.pop %v1293
        %v1295 = vmul.f32 %v1290, %v1294
        %v1296 = vpack.c.bf16 %v1295, %v1295
        %1297 = vrot.lane.b32.xlu0 %v1233, 44
        %v1298 = vpop.permute.xlu0 %1297
        %v1300 = vsel %vm669, %v1296, 0
        %v1303 = vsel %vm687, %v1298, 0
        %1305 = vmatprep.subr.bf16.mxu0 0
        %1306 = vmatpush1.bf16.msra.mxu0 0
        %1307 = vmatprep.subr.bf16.mxu0 0
        %1308 = vmatpush1.bf16.msra.mxu0 0
        %1309 = vmatprep.subr.bf16.mxu0 0
        %1310 = vmatpush1.bf16.msra.mxu0 0
        %1311 = vmatprep.subr.bf16.mxu0 0
        %1312 = vmatpush1.bf16.msra.mxu0 0
        %1313 = vmatprep.subr.bf16.mxu0 0
        %1314 = vmatpush1.bf16.msra.mxu0 0
        %1315 = vmatprep.subr.bf16.mxu0 0
        %1316 = vmatpush1.bf16.msra.mxu0 0
        %1317 = vmatprep.subr.bf16.mxu0 0
        %1318 = vmatpush1.bf16.msra.mxu0 0
        %1319 = vmatprep.subr.bf16.mxu0 0
        %1320 = vmatpush1.bf16.msra.mxu0 %v1303
        %1321 = vmatprep.subr.bf16.mxu0 0
        %1322 = vmatpush2.bf16.msra.mxu0 0
        %1323 = vmatprep.subr.bf16.mxu0 0
        %1324 = vmatpush2.bf16.msra.mxu0 0
        %1325 = vmatprep.subr.bf16.mxu0 0
        %1326 = vmatpush2.bf16.msra.mxu0 0
        %1327 = vmatprep.subr.bf16.mxu0 0
        %1328 = vmatpush2.bf16.msra.mxu0 0
        %1329 = vmatprep.subr.bf16.mxu0 0
        %1330 = vmatpush2.bf16.msra.mxu0 0
        %1331 = vmatprep.subr.bf16.mxu0 0
        %1332 = vmatpush2.bf16.msra.mxu0 0
        %1333 = vmatprep.subr.bf16.mxu0 0
        %1334 = vmatpush2.bf16.msra.mxu0 0
        %1335 = vmatprep.subr.bf16.mxu0 0
        %1336 = vmatpush2.bf16.msra.mxu0 0
        %1337 = vmatprep.mubr.bf16.mxu0 0
        %1338 = vmatmul.mubr.bf16.gmra.mxu0 %v1300
        %v1339 = vpop.f32.mrf.mxu0
        %v1340 = vadd.f32 0.0, %v1339
        %v1341 = vpop.f32.mrf.mxu0
        %v1342 = vpop.f32.mrf.mxu0
        %v1343 = vpop.f32.mrf.mxu0
        %1344 = vdwg.mxu0
        %v1345 = vpack.c.bf16 %v1340, %v1340
        %v1347 = vunpack.c.l.b16 %v1345
        %v1348 = vpack.c.b16 %v1347, %v1347
        %1349 = vrot.lane.b32.xlu0 %v1348, 20
        %v1350 = vpop.permute.xlu0 %1349
        %vm1352 = vcmask 191648
        %1353 = vst.msk [vmem:[#allocation3] sm:$0xf] %vm1352, %v1350
        %v1354 = vld [vmem:[#allocation2] sm:$0xf]
        %v1356 = vunpack.c.l.b16 %v1354
        %v1357 = vpack.c.b16 %v1356, %v1356
        %1358 = vrot.lane.b32.xlu0 %v1357, 104
        %v1359 = vpop.permute.xlu0 %1358
        %1360 = vrot.lane.b32.xlu0 %v1357, 72
        %v1361 = vpop.permute.xlu0 %1360
        %v1363 = vsel %vm621, %v1359, 0
        %v1366 = vsel %vm621, %v1361, 0
        %1368 = vmatprep.subr.bf16.mxu0 0
        %1369 = vmatpush1.bf16.xpose.msra.mxu0 0
        %1370 = vmatprep.subr.bf16.mxu0 0
        %1371 = vmatpush1.bf16.xpose.msra.mxu0 0
        %1372 = vmatprep.subr.bf16.mxu0 0
        %1373 = vmatpush1.bf16.xpose.msra.mxu0 0
        %1374 = vmatprep.subr.bf16.mxu0 0
        %1375 = vmatpush1.bf16.xpose.msra.mxu0 0
        %1376 = vmatprep.subr.bf16.mxu0 0
        %1377 = vmatpush1.bf16.xpose.msra.mxu0 0
        %1378 = vmatprep.subr.bf16.mxu0 0
        %1379 = vmatpush1.bf16.xpose.msra.mxu0 0
        %1380 = vmatprep.subr.bf16.mxu0 0
        %1381 = vmatpush1.bf16.xpose.msra.mxu0 0
        %1382 = vmatprep.subr.bf16.mxu0 0
        %1383 = vmatpush1.bf16.xpose.msra.mxu0 %v1366
        %1384 = vmatprep.subr.bf16.mxu0 0
        %1385 = vmatpush2.bf16.xpose.msra.mxu0 0
        %1386 = vmatprep.subr.bf16.mxu0 0
        %1387 = vmatpush2.bf16.xpose.msra.mxu0 0
        %1388 = vmatprep.subr.bf16.mxu0 0
        %1389 = vmatpush2.bf16.xpose.msra.mxu0 0
        %1390 = vmatprep.subr.bf16.mxu0 0
        %1391 = vmatpush2.bf16.xpose.msra.mxu0 0
        %1392 = vmatprep.subr.bf16.mxu0 0
        %1393 = vmatpush2.bf16.xpose.msra.mxu0 0
        %1394 = vmatprep.subr.bf16.mxu0 0
        %1395 = vmatpush2.bf16.xpose.msra.mxu0 0
        %1396 = vmatprep.subr.bf16.mxu0 0
        %1397 = vmatpush2.bf16.xpose.msra.mxu0 0
        %1398 = vmatprep.subr.bf16.mxu0 0
        %1399 = vmatpush2.bf16.xpose.msra.mxu0 0
        %1400 = vmatprep.mubr.bf16.mxu0 0
        %1401 = vmatmul.mubr.bf16.gmra.mxu0 %v1363
        %v1402 = vpop.f32.mrf.mxu0
        %v1403 = vadd.f32 0.0, %v1402
        %v1404 = vpop.f32.mrf.mxu0
        %v1405 = vpop.f32.mrf.mxu0
        %v1406 = vpop.f32.mrf.mxu0
        %1407 = vdwg.mxu0
        %v1408 = vmul.f32 %v1403, 0.5
        %v1409 = vsel %vm669, %v1408, -inf
        %1410 = vmax.xlane.f32.xlu0 %v1409
        %v1411 = vpop.xlane.xlu0 %1410
        %v1412 = vsub.f32 %v1408, %v1411
        %v1413 = vmul.f32 %v1412, 1.442695
        %v1414 = vpow.pop %v1413
        %v1415 = vsel %vm669, %v1414, 0.0
        %1416 = vadd.xlane.f32.xlu0 %v1415
        %v1417 = vpop.xlane.xlu0 %1416
        %v1418 = vrcp.pop %v1417
        %v1419 = vmul.f32 %v1414, %v1418
        %v1420 = vpack.c.bf16 %v1419, %v1419
        %1421 = vrot.lane.b32.xlu0 %v1357, 40
        %v1422 = vpop.permute.xlu0 %1421
        %v1424 = vsel %vm669, %v1420, 0
        %v1427 = vsel %vm687, %v1422, 0
        %1429 = vmatprep.subr.bf16.mxu0 0
        %1430 = vmatpush1.bf16.msra.mxu0 0
        %1431 = vmatprep.subr.bf16.mxu0 0
        %1432 = vmatpush1.bf16.msra.mxu0 0
        %1433 = vmatprep.subr.bf16.mxu0 0
        %1434 = vmatpush1.bf16.msra.mxu0 0
        %1435 = vmatprep.subr.bf16.mxu0 0
        %1436 = vmatpush1.bf16.msra.mxu0 0
        %1437 = vmatprep.subr.bf16.mxu0 0
        %1438 = vmatpush1.bf16.msra.mxu0 0
        %1439 = vmatprep.subr.bf16.mxu0 0
        %1440 = vmatpush1.bf16.msra.mxu0 0
        %1441 = vmatprep.subr.bf16.mxu0 0
        %1442 = vmatpush1.bf16.msra.mxu0 0
        %1443 = vmatprep.subr.bf16.mxu0 0
        %1444 = vmatpush1.bf16.msra.mxu0 %v1427
        %1445 = vmatprep.subr.bf16.mxu0 0
        %1446 = vmatpush2.bf16.msra.mxu0 0
        %1447 = vmatprep.subr.bf16.mxu0 0
        %1448 = vmatpush2.bf16.msra.mxu0 0
        %1449 = vmatprep.subr.bf16.mxu0 0
        %1450 = vmatpush2.bf16.msra.mxu0 0
        %1451 = vmatprep.subr.bf16.mxu0 0
        %1452 = vmatpush2.bf16.msra.mxu0 0
        %1453 = vmatprep.subr.bf16.mxu0 0
        %1454 = vmatpush2.bf16.msra.mxu0 0
        %1455 = vmatprep.subr.bf16.mxu0 0
        %1456 = vmatpush2.bf16.msra.mxu0 0
        %1457 = vmatprep.subr.bf16.mxu0 0
        %1458 = vmatpush2.bf16.msra.mxu0 0
        %1459 = vmatprep.subr.bf16.mxu0 0
        %1460 = vmatpush2.bf16.msra.mxu0 0
        %1461 = vmatprep.mubr.bf16.mxu0 0
        %1462 = vmatmul.mubr.bf16.gmra.mxu0 %v1424
        %v1463 = vpop.f32.mrf.mxu0
        %v1464 = vadd.f32 0.0, %v1463
        %v1465 = vpop.f32.mrf.mxu0
        %v1466 = vpop.f32.mrf.mxu0
        %v1467 = vpop.f32.mrf.mxu0
        %1468 = vdwg.mxu0
        %v1469 = vpack.c.bf16 %v1464, %v1464
        %v1471 = vunpack.c.l.b16 %v1469
        %v1472 = vpack.c.b16 %v1471, %v1471
        %1473 = vrot.lane.b32.xlu0 %v1472, 24
        %v1474 = vpop.permute.xlu0 %1473
        %vm1476 = vcmask 224448
        %1477 = vst.msk [vmem:[#allocation3] sm:$0xf] %vm1476, %v1474
        %v1478 = vld [vmem:[#allocation2] sm:$0xf]
        %v1480 = vunpack.c.l.b16 %v1478
        %v1481 = vpack.c.b16 %v1480, %v1480
        %1482 = vrot.lane.b32.xlu0 %v1481, 100
        %v1483 = vpop.permute.xlu0 %1482
        %1484 = vrot.lane.b32.xlu0 %v1481, 68
        %v1485 = vpop.permute.xlu0 %1484
        %v1487 = vsel %vm621, %v1483, 0
        %v1490 = vsel %vm621, %v1485, 0
        %1492 = vmatprep.subr.bf16.mxu0 0
        %1493 = vmatpush1.bf16.xpose.msra.mxu0 0
        %1494 = vmatprep.subr.bf16.mxu0 0
        %1495 = vmatpush1.bf16.xpose.msra.mxu0 0
        %1496 = vmatprep.subr.bf16.mxu0 0
        %1497 = vmatpush1.bf16.xpose.msra.mxu0 0
        %1498 = vmatprep.subr.bf16.mxu0 0
        %1499 = vmatpush1.bf16.xpose.msra.mxu0 0
        %1500 = vmatprep.subr.bf16.mxu0 0
        %1501 = vmatpush1.bf16.xpose.msra.mxu0 0
        %1502 = vmatprep.subr.bf16.mxu0 0
        %1503 = vmatpush1.bf16.xpose.msra.mxu0 0
        %1504 = vmatprep.subr.bf16.mxu0 0
        %1505 = vmatpush1.bf16.xpose.msra.mxu0 0
        %1506 = vmatprep.subr.bf16.mxu0 0
        %1507 = vmatpush1.bf16.xpose.msra.mxu0 %v1490
        %1508 = vmatprep.subr.bf16.mxu0 0
        %1509 = vmatpush2.bf16.xpose.msra.mxu0 0
        %1510 = vmatprep.subr.bf16.mxu0 0
        %1511 = vmatpush2.bf16.xpose.msra.mxu0 0
        %1512 = vmatprep.subr.bf16.mxu0 0
        %1513 = vmatpush2.bf16.xpose.msra.mxu0 0
        %1514 = vmatprep.subr.bf16.mxu0 0
        %1515 = vmatpush2.bf16.xpose.msra.mxu0 0
        %1516 = vmatprep.subr.bf16.mxu0 0
        %1517 = vmatpush2.bf16.xpose.msra.mxu0 0
        %1518 = vmatprep.subr.bf16.mxu0 0
        %1519 = vmatpush2.bf16.xpose.msra.mxu0 0
        %1520 = vmatprep.subr.bf16.mxu0 0
        %1521 = vmatpush2.bf16.xpose.msra.mxu0 0
        %1522 = vmatprep.subr.bf16.mxu0 0
        %1523 = vmatpush2.bf16.xpose.msra.mxu0 0
        %1524 = vmatprep.mubr.bf16.mxu0 0
        %1525 = vmatmul.mubr.bf16.gmra.mxu0 %v1487
        %v1526 = vpop.f32.mrf.mxu0
        %v1527 = vadd.f32 0.0, %v1526
        %v1528 = vpop.f32.mrf.mxu0
        %v1529 = vpop.f32.mrf.mxu0
        %v1530 = vpop.f32.mrf.mxu0
        %1531 = vdwg.mxu0
        %v1532 = vmul.f32 %v1527, 0.5
        %v1533 = vsel %vm669, %v1532, -inf
        %1534 = vmax.xlane.f32.xlu0 %v1533
        %v1535 = vpop.xlane.xlu0 %1534
        %v1536 = vsub.f32 %v1532, %v1535
        %v1537 = vmul.f32 %v1536, 1.442695
        %v1538 = vpow.pop %v1537
        %v1539 = vsel %vm669, %v1538, 0.0
        %1540 = vadd.xlane.f32.xlu0 %v1539
        %v1541 = vpop.xlane.xlu0 %1540
        %v1542 = vrcp.pop %v1541
        %v1543 = vmul.f32 %v1538, %v1542
        %v1544 = vpack.c.bf16 %v1543, %v1543
        %1545 = vrot.lane.b32.xlu0 %v1481, 36
        %v1546 = vpop.permute.xlu0 %1545
        %v1548 = vsel %vm669, %v1544, 0
        %v1551 = vsel %vm687, %v1546, 0
        %1553 = vmatprep.subr.bf16.mxu0 0
        %1554 = vmatpush1.bf16.msra.mxu0 0
        %1555 = vmatprep.subr.bf16.mxu0 0
        %1556 = vmatpush1.bf16.msra.mxu0 0
        %1557 = vmatprep.subr.bf16.mxu0 0
        %1558 = vmatpush1.bf16.msra.mxu0 0
        %1559 = vmatprep.subr.bf16.mxu0 0
        %1560 = vmatpush1.bf16.msra.mxu0 0
        %1561 = vmatprep.subr.bf16.mxu0 0
        %1562 = vmatpush1.bf16.msra.mxu0 0
        %1563 = vmatprep.subr.bf16.mxu0 0
        %1564 = vmatpush1.bf16.msra.mxu0 0
        %1565 = vmatprep.subr.bf16.mxu0 0
        %1566 = vmatpush1.bf16.msra.mxu0 0
        %1567 = vmatprep.subr.bf16.mxu0 0
        %1568 = vmatpush1.bf16.msra.mxu0 %v1551
        %1569 = vmatprep.subr.bf16.mxu0 0
        %1570 = vmatpush2.bf16.msra.mxu0 0
        %1571 = vmatprep.subr.bf16.mxu0 0
        %1572 = vmatpush2.bf16.msra.mxu0 0
        %1573 = vmatprep.subr.bf16.mxu0 0
        %1574 = vmatpush2.bf16.msra.mxu0 0
        %1575 = vmatprep.subr.bf16.mxu0 0
        %1576 = vmatpush2.bf16.msra.mxu0 0
        %1577 = vmatprep.subr.bf16.mxu0 0
        %1578 = vmatpush2.bf16.msra.mxu0 0
        %1579 = vmatprep.subr.bf16.mxu0 0
        %1580 = vmatpush2.bf16.msra.mxu0 0
        %1581 = vmatprep.subr.bf16.mxu0 0
        %1582 = vmatpush2.bf16.msra.mxu0 0
        %1583 = vmatprep.subr.bf16.mxu0 0
        %1584 = vmatpush2.bf16.msra.mxu0 0
        %1585 = vmatprep.mubr.bf16.mxu0 0
        %1586 = vmatmul.mubr.bf16.gmra.mxu0 %v1548
        %v1587 = vpop.f32.mrf.mxu0
        %v1588 = vadd.f32 0.0, %v1587
        %v1589 = vpop.f32.mrf.mxu0
        %v1590 = vpop.f32.mrf.mxu0
        %v1591 = vpop.f32.mrf.mxu0
        %1592 = vdwg.mxu0
        %v1593 = vpack.c.bf16 %v1588, %v1588
        %v1595 = vunpack.c.l.b16 %v1593
        %v1596 = vpack.c.b16 %v1595, %v1595
        %1597 = vrot.lane.b32.xlu0 %v1596, 28
        %v1598 = vpop.permute.xlu0 %1597
        %vm1600 = vcmask 257248
        %1601 = vst.msk [vmem:[#allocation3] sm:$0xf] %vm1600, %v1598
        %v1602 = vld [vmem:[#allocation3] sm:$0xf]
        %v1603 = vld [vmem:[#allocation10] sm:$0xf]
        %v1604 = vld [vmem:[#allocation10 + $0x4] sm:$0xf]
        %v1605 = vld [vmem:[#allocation10 + $0x8] sm:$0xf]
        %v1606 = vld [vmem:[#allocation10 + $0xc] sm:$0xf]
        %v1607 = vld [vmem:[%s8] sm:$0x1]
        %v1609 = vlaneseq
        %v1610 = vshrl.u32 %v1609, 7
        %v1611 = vsub.s32 0, %v1610
        %v1612 = vrot.slane %v1607, %v1611
        %v1618 = vunpack.c.l.b16 %v1603
        %v1619 = vunpack.c.l.b16 %v1604
        %v1620 = vunpack.c.l.b16 %v1605
        %v1621 = vunpack.c.l.b16 %v1606
        %v1622 = vpack.c.b16 %v1619, %v1618
        %v1623 = vpack.c.b16 %v1621, %v1620
        %v1627 = vsel %vm471, %v1602, 0
        %1629 = vmatprep.subr.bf16.mxu0 0
        %1630 = vmatpush1.bf16.msra.mxu0 0
        %1631 = vmatprep.subr.bf16.mxu0 0
        %1632 = vmatpush1.bf16.msra.mxu0 0
        %1633 = vmatprep.subr.bf16.mxu0 0
        %1634 = vmatpush1.bf16.msra.mxu0 0
        %1635 = vmatprep.subr.bf16.mxu0 0
        %1636 = vmatpush1.bf16.msra.mxu0 0
        %1637 = vmatprep.subr.bf16.mxu0 0
        %1638 = vmatpush1.bf16.msra.mxu0 0
        %1639 = vmatprep.subr.bf16.mxu0 0
        %1640 = vmatpush1.bf16.msra.mxu0 0
        %1641 = vmatprep.subr.bf16.mxu0 0
        %1642 = vmatpush1.bf16.msra.mxu0 %v1623
        %1643 = vmatprep.subr.bf16.mxu0 0
        %1644 = vmatpush1.bf16.msra.mxu0 %v1622
        %1645 = vmatprep.subr.bf16.mxu0 0
        %1646 = vmatpush2.bf16.msra.mxu0 0
        %1647 = vmatprep.subr.bf16.mxu0 0
        %1648 = vmatpush2.bf16.msra.mxu0 0
        %1649 = vmatprep.subr.bf16.mxu0 0
        %1650 = vmatpush2.bf16.msra.mxu0 0
        %1651 = vmatprep.subr.bf16.mxu0 0
        %1652 = vmatpush2.bf16.msra.mxu0 0
        %1653 = vmatprep.subr.bf16.mxu0 0
        %1654 = vmatpush2.bf16.msra.mxu0 0
        %1655 = vmatprep.subr.bf16.mxu0 0
        %1656 = vmatpush2.bf16.msra.mxu0 0
        %1657 = vmatprep.subr.bf16.mxu0 0
        %1658 = vmatpush2.bf16.msra.mxu0 0
        %1659 = vmatprep.subr.bf16.mxu0 0
        %1660 = vmatpush2.bf16.msra.mxu0 0
        %1661 = vmatprep.mubr.bf16.mxu0 0
        %1662 = vmatmul.mubr.bf16.gmra.mxu0 %v1627
        %v1663 = vpop.f32.mrf.mxu0
        %v1664 = vadd.f32 %v1612, %v1663
        %v1665 = vpop.f32.mrf.mxu0
        %v1666 = vpop.f32.mrf.mxu0
        %v1667 = vpop.f32.mrf.mxu0
        %1668 = vdwg.mxu0
        %v1669 = vadd.f32 %v544, %v1664
        %v1670 = vld [vmem:[%s9] sm:$0x1]
        %v1671 = vld [vmem:[%s10] sm:$0x1]
        %v1672 = vsel %vm471, %v1669, 0.0
        %1673 = vadd.xlane.f32.xlu0 %v1672
        %v1674 = vpop.xlane.xlu0 %1673
        %v1675 = vmul.f32 %v1674, %v520
        %v1676 = vsub.f32 %v1669, %v1675
        %v1677 = vmul.f32 %v1676, %v1676
        %v1678 = vsel %vm471, %v1677, 0.0
        %1679 = vadd.xlane.f32.xlu0 %v1678
        %v1680 = vpop.xlane.xlu0 %1679
        %v1681 = vmul.f32 %v1680, %v520
        %v1682 = vadd.f32 %v1681, 1e-05
        %v1683 = vrsqrt.pop %v1682
        %v1684 = vmul.f32 %v1676, %v1683
        %v1686 = vlaneseq
        %v1687 = vshrl.u32 %v1686, 7
        %v1688 = vsub.s32 0, %v1687
        %v1689 = vrot.slane %v1670, %v1688
        %v1691 = vmul.f32 %v1684, %v1689
        %v1693 = vlaneseq
        %v1694 = vshrl.u32 %v1693, 7
        %v1695 = vsub.s32 0, %v1694
        %v1696 = vrot.slane %v1671, %v1695
        %v1698 = vadd.f32 %v1691, %v1696
        %v1699 = vpack.c.bf16 %v1698, %v1698
        %vm1700 = vcmask 257024
        %1701 = vst.msk [vmem:[%s445] sm:$0xf] %vm1700, %v1699
        %s1702 = sand.u32 %s274, 1
        %s1703 = scalar_lea.sflag [#allocation6], %s1702
        %s1704 = sand.u32 %s274, 1
        %s1705 = smul.addr %s1704, 4
        %s1706 = scalar_lea.vmem [#allocation12], %s1705
        // Predicated region
        $region81: #{tpu_custom_call.1} parent=63 // pred_check
          %p1707 = pneg %p284
        $region82: #{tpu_custom_call.1} parent=63 // pred_check_branch
          %1709 = sbr.rel (%p1707) target = $region84
        $region83: #{tpu_custom_call.1} parent=63 // pred_region
          %s1711 = ssub.s32 64, 64
          %1712 = vsyncadd %s1703, %s1711
          %s1713 = smul.addr %s30, 64
          %s1714 = scalar_lea.hbm %s11, %s1713
          %s1716 = sshll.u32 %s1706, 4
          %s1717 = int_to_ptr.vmem [resolvable:$true] %s1716
          %1719 = dma.vmem_to_hbm [thread:$0]  %s1717, 64, %s1714, %s1703
        $region84: #{tpu_custom_call.1} parent=63 // pred_fallthru
          _
      $region64: #{tpu_custom_call.1} parent=5 // pred_fallthru
        _
      %p1720 = scmp.le.s32.totalorder 2, %s25
      // Predicated region
      $region85: #{tpu_custom_call.1} parent=5 // pred_check
        %p1721 = pneg %p1720
      $region86: #{tpu_custom_call.1} parent=5 // pred_check_branch
        %1723 = sbr.rel (%p1721) target = $region88
      $region87: #{tpu_custom_call.1} parent=5 // pred_region
        %s1724 = ssub.s32 %s25, 2
        // Predicated region
        $region89: #{tpu_custom_call.1} parent=87 // pred_check
          %p1725 = pneg %p290
        $region90: #{tpu_custom_call.1} parent=87 // pred_check_branch
          %1727 = sbr.rel (%p1725) target = $region92
        $region91: #{tpu_custom_call.1} parent=87 // pred_region
          %s1728 = sand.u32 %s275, 1
          %s1729 = scalar_lea.sflag [#allocation6], %s1728
          %s1730 = sand.u32 %s275, 1
          %s1731 = smul.addr %s1730, 4
          %s1732 = scalar_lea.vmem [#allocation12], %s1731
          %1733 = dma.done %s1729, 64
        $region92: #{tpu_custom_call.1} parent=87 // pred_fallthru
          _
      $region88: #{tpu_custom_call.1} parent=5 // pred_fallthru
        _
    $region6: #{tpu_custom_call.1} parent=1 // loop_footer
      %s29 = sadd.s32 1, %s25
    $region7: #{tpu_custom_call.1} parent=1 // loop_footer_branch
      %24 = sbr.rel target = $region3
    $region8: #{tpu_custom_call.1} parent=1 // loop_exit
      _
    %1734 = vsyncpa [#allocation5], 1
    %s1735 = scalar_lea.sflag [#allocation5], 1
    %1736 = vsyncpa %s1735, 1
    %1737 = vsyncpa [#allocation8], 1
    %1738 = vsyncpa [#allocation11], 1
    %1739 = vsyncpa [#allocation6], 1
    %s1740 = scalar_lea.sflag [#allocation6], 1
    %1741 = vsyncpa %s1740, 1

</llo_original>
